<compile_context>
chip_gen: v6e
topology: v6e:2x2x1
jax: 0.10.0
libtpu: 0.0.40
codegen_flags: <defaults>
</compile_context>

<pallas_src>
import jax
import jax.numpy as jnp
from jax.experimental import pallas as pl
from jax.experimental.pallas import tpu as pltpu

# Layer sizes of HeatSupplyMLP: 9 -> 500 -> 250 -> 100 -> 50 -> 50 -> 50 -> 25 -> 25 -> 1
LAYER_SIZES = [9, 500, 250, 100, 50, 50, 50, 25, 25, 1]
# Activation applied after each affine transform; last layer is linear.
ACTS = ["sigmoid", "sigmoid", "sigmoid", "relu", "relu", "relu", "relu", "sigmoid", None]
LANE = 128


def _round_up(v, m):
    return (v + m - 1) // m * m


PADDED_SIZES = [_round_up(s, LANE) for s in LAYER_SIZES]  # 128,512,256,128,...,128


def _apply_act(h, act):
    if act == "sigmoid":
        return jax.nn.sigmoid(h)
    if act == "relu":
        return jnp.maximum(h, 0.0)
    return h


def mlp_kernel(x_ref, *refs):
    # refs = (w1, b1, ..., w9, b9, out_ref); weights bf16, biases f32.
    out_ref = refs[-1]
    param_refs = refs[:-1]
    h = x_ref[...]  # (B_TILE, 128) f32, zero-padded feature columns
    for li in range(len(ACTS)):
        w = param_refs[2 * li][...]       # (in_pad, out_pad) bf16, resident
        b = param_refs[2 * li + 1][...]   # (1, out_pad) f32
        # bf16 MXU operands, f32 accumulation; pointwise math stays f32.
        acc = jnp.dot(h.astype(jnp.bfloat16), w, preferred_element_type=jnp.float32)
        h = _apply_act(acc + b, ACTS[li])
    out_ref[...] = h  # (B_TILE, 128) lane-dense store; col 0 is the real output


def pack_params(params):
    """Pad each (w, b) to 128-multiples with zeros; weights -> bf16, biases -> f32."""
    packed = []
    for li in range(len(ACTS)):
        w = params[2 * li]        # (in, out) f32
        b = params[2 * li + 1]    # (1, out) f32
        in_p, out_p = PADDED_SIZES[li], PADDED_SIZES[li + 1]
        w_pad = jnp.zeros((in_p, out_p), jnp.float32).at[: w.shape[0], : w.shape[1]].set(w)
        b_pad = jnp.zeros((1, out_p), jnp.float32).at[:, : b.shape[1]].set(b)
        packed.append(w_pad.astype(jnp.bfloat16))
        packed.append(b_pad)
    return packed


@jax.jit
def heat_supply_mlp(x, packed_params):
    """x: (B, 9) f32; packed_params: flat list from pack_params. Returns (B,) f32."""
    B = x.shape[0]
    in_pad = PADDED_SIZES[0]
    out_pad = PADDED_SIZES[-1]

    # Tile choice: 256 rows (multiple of 256 for v6e/v7x MXU, of 128 for v5e).
    # Tiny batches: one 8-aligned tile, no point chasing MXU tuning there.
    b_tile = 256 if B >= 256 else _round_up(max(B, 8), 8)
    b_pad = _round_up(B, b_tile)

    x_p = jnp.zeros((b_pad, in_pad), jnp.float32).at[:B, : x.shape[1]].set(x)

    grid = (b_pad // b_tile,)
    in_specs = [pl.BlockSpec((b_tile, in_pad), lambda i: (i, 0))]
    for p in packed_params:
        # Full-array block, constant index_map -> fetched once, stays resident.
        in_specs.append(pl.BlockSpec(p.shape, lambda i: (0, 0)))
    out_spec = pl.BlockSpec((b_tile, out_pad), lambda i: (i, 0))

    out = pl.pallas_call(
        mlp_kernel,
        out_shape=jax.ShapeDtypeStruct((b_pad, out_pad), jnp.float32),
        grid=grid,
        in_specs=in_specs,
        out_specs=out_spec,
        compiler_params=pltpu.CompilerParams(
            dimension_semantics=("parallel",),  # shard batch tiles across TCs on v7x
        ),
    )(x_p, *packed_params)
    # Matches PyTorch `output[:, 0]` -> shape (B,)
    return out[:B, 0]


def init_params(key):
    """Deterministic init mimicking nn.Linear default (uniform +/- 1/sqrt(fan_in))."""
    params = []
    for i in range(len(LAYER_SIZES) - 1):
        fan_in = LAYER_SIZES[i]
        fan_out = LAYER_SIZES[i + 1]
        key, kw, kb = jax.random.split(key, 3)
        bound = 1.0 / (fan_in ** 0.5)
        w = jax.random.uniform(kw, (fan_in, fan_out), jnp.float32, -bound, bound)
        b = jax.random.uniform(kb, (1, fan_out), jnp.float32, -bound, bound)
        params.append(w)
        params.append(b)
    return params


def reference_forward_f32(x, params):
    """Plain-JAX f32 reference (module semantics)."""
    h = x
    for li in range(len(ACTS)):
        w = params[2 * li]
        b = params[2 * li + 1]
        h = _apply_act(h @ w + b, ACTS[li])
    return h[:, 0]


def reference_forward_bf16(x, params):
    """Reference matching the kernel's bf16-operand / f32-accumulate matmuls."""
    h = x
    for li in range(len(ACTS)):
        w = params[2 * li]
        b = params[2 * li + 1]
        acc = jnp.dot(h.astype(jnp.bfloat16), w.astype(jnp.bfloat16),
                      preferred_element_type=jnp.float32)
        h = _apply_act(acc + b, ACTS[li])
    return h[:, 0]


if __name__ == "__main__":
    key = jax.random.PRNGKey(0)
    key, kx = jax.random.split(key)

    B = 8
    x = jax.random.normal(kx, (B, LAYER_SIZES[0]), jnp.float32)
    params = init_params(key)
    packed = pack_params(params)

    out = heat_supply_mlp(x, packed)
    out = jax.block_until_ready(out)
    assert out.shape == (B,), out.shape

    # Tight check vs a reference using the same bf16-operand matmuls.
    ref_bf16 = reference_forward_bf16(x, params)
    assert jnp.allclose(out, ref_bf16, atol=2e-3, rtol=2e-3), (out, ref_bf16)

    # Loose check vs the full-f32 module semantics (bf16 operand drift only).
    ref_f32 = reference_forward_f32(x, params)
    assert jnp.allclose(out, ref_f32, atol=5e-2, rtol=5e-2), (out, ref_f32)

    print("KERNEL_OK")
</pallas_src>

<mosaic_0001>
module attributes {stable_mosaic.version = 11 : i64} {
  func.func @mlp_kernel(%arg0: i32, %arg1: memref<8x128xf32, #tpu.memory_space<vmem>>, %arg2: memref<128x512xbf16, #tpu.memory_space<vmem>>, %arg3: memref<1x512xf32, #tpu.memory_space<vmem>>, %arg4: memref<512x256xbf16, #tpu.memory_space<vmem>>, %arg5: memref<1x256xf32, #tpu.memory_space<vmem>>, %arg6: memref<256x128xbf16, #tpu.memory_space<vmem>>, %arg7: memref<1x128xf32, #tpu.memory_space<vmem>>, %arg8: memref<128x128xbf16, #tpu.memory_space<vmem>>, %arg9: memref<1x128xf32, #tpu.memory_space<vmem>>, %arg10: memref<128x128xbf16, #tpu.memory_space<vmem>>, %arg11: memref<1x128xf32, #tpu.memory_space<vmem>>, %arg12: memref<128x128xbf16, #tpu.memory_space<vmem>>, %arg13: memref<1x128xf32, #tpu.memory_space<vmem>>, %arg14: memref<128x128xbf16, #tpu.memory_space<vmem>>, %arg15: memref<1x128xf32, #tpu.memory_space<vmem>>, %arg16: memref<128x128xbf16, #tpu.memory_space<vmem>>, %arg17: memref<1x128xf32, #tpu.memory_space<vmem>>, %arg18: memref<128x128xbf16, #tpu.memory_space<vmem>>, %arg19: memref<1x128xf32, #tpu.memory_space<vmem>>, %arg20: memref<8x128xf32, #tpu.memory_space<vmem>>) attributes {dimension_semantics = [#tpu.dimension_semantics<parallel>], iteration_bounds = array<i64: 1>, scalar_prefetch = 0 : i64, scratch_operands = 0 : i64, tpu.core_type = #tpu.core_type<tc>, window_params = [{transform_indices = @transform_0, window_bounds = array<i64: 8, 128>}, {pipeline_mode = #tpu.pipeline_mode<synchronous>, transform_indices = @transform_1, window_bounds = array<i64: 128, 512>}, {pipeline_mode = #tpu.pipeline_mode<synchronous>, transform_indices = @transform_2, window_bounds = array<i64: 1, 512>}, {pipeline_mode = #tpu.pipeline_mode<synchronous>, transform_indices = @transform_3, window_bounds = array<i64: 512, 256>}, {pipeline_mode = #tpu.pipeline_mode<synchronous>, transform_indices = @transform_4, window_bounds = array<i64: 1, 256>}, {pipeline_mode = #tpu.pipeline_mode<synchronous>, transform_indices = @transform_5, window_bounds = array<i64: 256, 128>}, {pipeline_mode = #tpu.pipeline_mode<synchronous>, transform_indices = @transform_6, window_bounds = array<i64: 1, 128>}, {pipeline_mode = #tpu.pipeline_mode<synchronous>, transform_indices = @transform_7, window_bounds = array<i64: 128, 128>}, {pipeline_mode = #tpu.pipeline_mode<synchronous>, transform_indices = @transform_8, window_bounds = array<i64: 1, 128>}, {pipeline_mode = #tpu.pipeline_mode<synchronous>, transform_indices = @transform_9, window_bounds = array<i64: 128, 128>}, {pipeline_mode = #tpu.pipeline_mode<synchronous>, transform_indices = @transform_10, window_bounds = array<i64: 1, 128>}, {pipeline_mode = #tpu.pipeline_mode<synchronous>, transform_indices = @transform_11, window_bounds = array<i64: 128, 128>}, {pipeline_mode = #tpu.pipeline_mode<synchronous>, transform_indices = @transform_12, window_bounds = array<i64: 1, 128>}, {pipeline_mode = #tpu.pipeline_mode<synchronous>, transform_indices = @transform_13, window_bounds = array<i64: 128, 128>}, {pipeline_mode = #tpu.pipeline_mode<synchronous>, transform_indices = @transform_14, window_bounds = array<i64: 1, 128>}, {pipeline_mode = #tpu.pipeline_mode<synchronous>, transform_indices = @transform_15, window_bounds = array<i64: 128, 128>}, {pipeline_mode = #tpu.pipeline_mode<synchronous>, transform_indices = @transform_16, window_bounds = array<i64: 1, 128>}, {pipeline_mode = #tpu.pipeline_mode<synchronous>, transform_indices = @transform_17, window_bounds = array<i64: 128, 128>}, {pipeline_mode = #tpu.pipeline_mode<synchronous>, transform_indices = @transform_18, window_bounds = array<i64: 1, 128>}, {transform_indices = @transform_19, window_bounds = array<i64: 8, 128>}]} {
    %c0 = arith.constant 0 : index
    %c0_0 = arith.constant 0 : index
    %0 = vector.load %arg1[%c0, %c0_0] : memref<8x128xf32, #tpu.memory_space<vmem>>, vector<8x128xf32>
    %c0_1 = arith.constant 0 : index
    %c0_2 = arith.constant 0 : index
    %1 = vector.load %arg2[%c0_1, %c0_2] : memref<128x512xbf16, #tpu.memory_space<vmem>>, vector<128x512xbf16>
    %c0_3 = arith.constant 0 : index
    %c0_4 = arith.constant 0 : index
    %2 = vector.load %arg3[%c0_3, %c0_4] : memref<1x512xf32, #tpu.memory_space<vmem>>, vector<1x512xf32>
    %3 = arith.truncf %0 : vector<8x128xf32> to vector<8x128xbf16>
    %cst = arith.constant dense<0.000000e+00> : vector<8x512xf32>
    %4 = tpu.matmul %3, %1, %cst {dimension_numbers = #tpu.dot_dimension_numbers<[1], [0], [0], [1], [0, 0, 1, 1], [], []>} : vector<8x128xbf16>, vector<128x512xbf16>, vector<8x512xf32> -> vector<8x512xf32>
    %5 = vector.broadcast %2 : vector<1x512xf32> to vector<8x512xf32>
    %6 = arith.addf %4, %5 : vector<8x512xf32>
    %7 = arith.negf %6 : vector<8x512xf32>
    %8 = math.exp %7 : vector<8x512xf32>
    %cst_5 = arith.constant 1.000000e+00 : f32
    %9 = vector.broadcast %cst_5 : f32 to vector<8x512xf32>
    %10 = arith.addf %9, %8 : vector<8x512xf32>
    %11 = arith.divf %9, %10 : vector<8x512xf32>
    %c0_6 = arith.constant 0 : index
    %c0_7 = arith.constant 0 : index
    %12 = vector.load %arg4[%c0_6, %c0_7] : memref<512x256xbf16, #tpu.memory_space<vmem>>, vector<512x256xbf16>
    %c0_8 = arith.constant 0 : index
    %c0_9 = arith.constant 0 : index
    %13 = vector.load %arg5[%c0_8, %c0_9] : memref<1x256xf32, #tpu.memory_space<vmem>>, vector<1x256xf32>
    %14 = arith.truncf %11 : vector<8x512xf32> to vector<8x512xbf16>
    %cst_10 = arith.constant dense<0.000000e+00> : vector<8x256xf32>
    %15 = tpu.matmul %14, %12, %cst_10 {dimension_numbers = #tpu.dot_dimension_numbers<[1], [0], [0], [1], [0, 0, 1, 1], [], []>} : vector<8x512xbf16>, vector<512x256xbf16>, vector<8x256xf32> -> vector<8x256xf32>
    %16 = vector.broadcast %13 : vector<1x256xf32> to vector<8x256xf32>
    %17 = arith.addf %15, %16 : vector<8x256xf32>
    %18 = arith.negf %17 : vector<8x256xf32>
    %19 = math.exp %18 : vector<8x256xf32>
    %cst_11 = arith.constant 1.000000e+00 : f32
    %20 = vector.broadcast %cst_11 : f32 to vector<8x256xf32>
    %21 = arith.addf %20, %19 : vector<8x256xf32>
    %22 = arith.divf %20, %21 : vector<8x256xf32>
    %c0_12 = arith.constant 0 : index
    %c0_13 = arith.constant 0 : index
    %23 = vector.load %arg6[%c0_12, %c0_13] : memref<256x128xbf16, #tpu.memory_space<vmem>>, vector<256x128xbf16>
    %c0_14 = arith.constant 0 : index
    %c0_15 = arith.constant 0 : index
    %24 = vector.load %arg7[%c0_14, %c0_15] : memref<1x128xf32, #tpu.memory_space<vmem>>, vector<1x128xf32>
    %25 = arith.truncf %22 : vector<8x256xf32> to vector<8x256xbf16>
    %cst_16 = arith.constant dense<0.000000e+00> : vector<8x128xf32>
    %26 = tpu.matmul %25, %23, %cst_16 {dimension_numbers = #tpu.dot_dimension_numbers<[1], [0], [0], [1], [0, 0, 1, 1], [], []>} : vector<8x256xbf16>, vector<256x128xbf16>, vector<8x128xf32> -> vector<8x128xf32>
    %27 = vector.broadcast %24 : vector<1x128xf32> to vector<8x128xf32>
    %28 = arith.addf %26, %27 : vector<8x128xf32>
    %29 = arith.negf %28 : vector<8x128xf32>
    %30 = math.exp %29 : vector<8x128xf32>
    %cst_17 = arith.constant 1.000000e+00 : f32
    %31 = vector.broadcast %cst_17 : f32 to vector<8x128xf32>
    %32 = arith.addf %31, %30 : vector<8x128xf32>
    %33 = arith.divf %31, %32 : vector<8x128xf32>
    %c0_18 = arith.constant 0 : index
    %c0_19 = arith.constant 0 : index
    %34 = vector.load %arg8[%c0_18, %c0_19] : memref<128x128xbf16, #tpu.memory_space<vmem>>, vector<128x128xbf16>
    %c0_20 = arith.constant 0 : index
    %c0_21 = arith.constant 0 : index
    %35 = vector.load %arg9[%c0_20, %c0_21] : memref<1x128xf32, #tpu.memory_space<vmem>>, vector<1x128xf32>
    %36 = arith.truncf %33 : vector<8x128xf32> to vector<8x128xbf16>
    %cst_22 = arith.constant dense<0.000000e+00> : vector<8x128xf32>
    %37 = tpu.matmul %36, %34, %cst_22 {dimension_numbers = #tpu.dot_dimension_numbers<[1], [0], [0], [1], [0, 0, 1, 1], [], []>} : vector<8x128xbf16>, vector<128x128xbf16>, vector<8x128xf32> -> vector<8x128xf32>
    %38 = vector.broadcast %35 : vector<1x128xf32> to vector<8x128xf32>
    %39 = arith.addf %37, %38 : vector<8x128xf32>
    %cst_23 = arith.constant 0.000000e+00 : f32
    %40 = vector.broadcast %cst_23 : f32 to vector<8x128xf32>
    %41 = arith.maximumf %39, %40 : vector<8x128xf32>
    %c0_24 = arith.constant 0 : index
    %c0_25 = arith.constant 0 : index
    %42 = vector.load %arg10[%c0_24, %c0_25] : memref<128x128xbf16, #tpu.memory_space<vmem>>, vector<128x128xbf16>
    %c0_26 = arith.constant 0 : index
    %c0_27 = arith.constant 0 : index
    %43 = vector.load %arg11[%c0_26, %c0_27] : memref<1x128xf32, #tpu.memory_space<vmem>>, vector<1x128xf32>
    %44 = arith.truncf %41 : vector<8x128xf32> to vector<8x128xbf16>
    %cst_28 = arith.constant dense<0.000000e+00> : vector<8x128xf32>
    %45 = tpu.matmul %44, %42, %cst_28 {dimension_numbers = #tpu.dot_dimension_numbers<[1], [0], [0], [1], [0, 0, 1, 1], [], []>} : vector<8x128xbf16>, vector<128x128xbf16>, vector<8x128xf32> -> vector<8x128xf32>
    %46 = vector.broadcast %43 : vector<1x128xf32> to vector<8x128xf32>
    %47 = arith.addf %45, %46 : vector<8x128xf32>
    %cst_29 = arith.constant 0.000000e+00 : f32
    %48 = vector.broadcast %cst_29 : f32 to vector<8x128xf32>
    %49 = arith.maximumf %47, %48 : vector<8x128xf32>
    %c0_30 = arith.constant 0 : index
    %c0_31 = arith.constant 0 : index
    %50 = vector.load %arg12[%c0_30, %c0_31] : memref<128x128xbf16, #tpu.memory_space<vmem>>, vector<128x128xbf16>
    %c0_32 = arith.constant 0 : index
    %c0_33 = arith.constant 0 : index
    %51 = vector.load %arg13[%c0_32, %c0_33] : memref<1x128xf32, #tpu.memory_space<vmem>>, vector<1x128xf32>
    %52 = arith.truncf %49 : vector<8x128xf32> to vector<8x128xbf16>
    %cst_34 = arith.constant dense<0.000000e+00> : vector<8x128xf32>
    %53 = tpu.matmul %52, %50, %cst_34 {dimension_numbers = #tpu.dot_dimension_numbers<[1], [0], [0], [1], [0, 0, 1, 1], [], []>} : vector<8x128xbf16>, vector<128x128xbf16>, vector<8x128xf32> -> vector<8x128xf32>
    %54 = vector.broadcast %51 : vector<1x128xf32> to vector<8x128xf32>
    %55 = arith.addf %53, %54 : vector<8x128xf32>
    %cst_35 = arith.constant 0.000000e+00 : f32
    %56 = vector.broadcast %cst_35 : f32 to vector<8x128xf32>
    %57 = arith.maximumf %55, %56 : vector<8x128xf32>
    %c0_36 = arith.constant 0 : index
    %c0_37 = arith.constant 0 : index
    %58 = vector.load %arg14[%c0_36, %c0_37] : memref<128x128xbf16, #tpu.memory_space<vmem>>, vector<128x128xbf16>
    %c0_38 = arith.constant 0 : index
    %c0_39 = arith.constant 0 : index
    %59 = vector.load %arg15[%c0_38, %c0_39] : memref<1x128xf32, #tpu.memory_space<vmem>>, vector<1x128xf32>
    %60 = arith.truncf %57 : vector<8x128xf32> to vector<8x128xbf16>
    %cst_40 = arith.constant dense<0.000000e+00> : vector<8x128xf32>
    %61 = tpu.matmul %60, %58, %cst_40 {dimension_numbers = #tpu.dot_dimension_numbers<[1], [0], [0], [1], [0, 0, 1, 1], [], []>} : vector<8x128xbf16>, vector<128x128xbf16>, vector<8x128xf32> -> vector<8x128xf32>
    %62 = vector.broadcast %59 : vector<1x128xf32> to vector<8x128xf32>
    %63 = arith.addf %61, %62 : vector<8x128xf32>
    %cst_41 = arith.constant 0.000000e+00 : f32
    %64 = vector.broadcast %cst_41 : f32 to vector<8x128xf32>
    %65 = arith.maximumf %63, %64 : vector<8x128xf32>
    %c0_42 = arith.constant 0 : index
    %c0_43 = arith.constant 0 : index
    %66 = vector.load %arg16[%c0_42, %c0_43] : memref<128x128xbf16, #tpu.memory_space<vmem>>, vector<128x128xbf16>
    %c0_44 = arith.constant 0 : index
    %c0_45 = arith.constant 0 : index
    %67 = vector.load %arg17[%c0_44, %c0_45] : memref<1x128xf32, #tpu.memory_space<vmem>>, vector<1x128xf32>
    %68 = arith.truncf %65 : vector<8x128xf32> to vector<8x128xbf16>
    %cst_46 = arith.constant dense<0.000000e+00> : vector<8x128xf32>
    %69 = tpu.matmul %68, %66, %cst_46 {dimension_numbers = #tpu.dot_dimension_numbers<[1], [0], [0], [1], [0, 0, 1, 1], [], []>} : vector<8x128xbf16>, vector<128x128xbf16>, vector<8x128xf32> -> vector<8x128xf32>
    %70 = vector.broadcast %67 : vector<1x128xf32> to vector<8x128xf32>
    %71 = arith.addf %69, %70 : vector<8x128xf32>
    %72 = arith.negf %71 : vector<8x128xf32>
    %73 = math.exp %72 : vector<8x128xf32>
    %cst_47 = arith.constant 1.000000e+00 : f32
    %74 = vector.broadcast %cst_47 : f32 to vector<8x128xf32>
    %75 = arith.addf %74, %73 : vector<8x128xf32>
    %76 = arith.divf %74, %75 : vector<8x128xf32>
    %c0_48 = arith.constant 0 : index
    %c0_49 = arith.constant 0 : index
    %77 = vector.load %arg18[%c0_48, %c0_49] : memref<128x128xbf16, #tpu.memory_space<vmem>>, vector<128x128xbf16>
    %c0_50 = arith.constant 0 : index
    %c0_51 = arith.constant 0 : index
    %78 = vector.load %arg19[%c0_50, %c0_51] : memref<1x128xf32, #tpu.memory_space<vmem>>, vector<1x128xf32>
    %79 = arith.truncf %76 : vector<8x128xf32> to vector<8x128xbf16>
    %cst_52 = arith.constant dense<0.000000e+00> : vector<8x128xf32>
    %80 = tpu.matmul %79, %77, %cst_52 {dimension_numbers = #tpu.dot_dimension_numbers<[1], [0], [0], [1], [0, 0, 1, 1], [], []>} : vector<8x128xbf16>, vector<128x128xbf16>, vector<8x128xf32> -> vector<8x128xf32>
    %81 = vector.broadcast %78 : vector<1x128xf32> to vector<8x128xf32>
    %82 = arith.addf %80, %81 : vector<8x128xf32>
    %c0_53 = arith.constant 0 : index
    %c0_54 = arith.constant 0 : index
    %83 = vector.load %arg20[%c0_53, %c0_54] : memref<8x128xf32, #tpu.memory_space<vmem>>, vector<8x128xf32>
    tpu.vector_store %arg20[%c0_53, %c0_54], %82 {strides = array<i32>} : memref<8x128xf32, #tpu.memory_space<vmem>>, vector<8x128xf32>,
    return
  }
  func.func @transform_0(%arg0: i32) -> (i32, i32) {
    %c0_i32 = arith.constant 0 : i32
    %c0_i32_0 = arith.constant 0 : i32
    return %arg0, %c0_i32 : i32, i32
  }
  func.func @transform_1(%arg0: i32) -> (i32, i32) {
    %c0_i32 = arith.constant 0 : i32
    %c0_i32_0 = arith.constant 0 : i32
    %c0_i32_1 = arith.constant 0 : i32
    return %c0_i32, %c0_i32_0 : i32, i32
  }
  func.func @transform_2(%arg0: i32) -> (i32, i32) {
    %c0_i32 = arith.constant 0 : i32
    %c0_i32_0 = arith.constant 0 : i32
    %c0_i32_1 = arith.constant 0 : i32
    return %c0_i32, %c0_i32_0 : i32, i32
  }
  func.func @transform_3(%arg0: i32) -> (i32, i32) {
    %c0_i32 = arith.constant 0 : i32
    %c0_i32_0 = arith.constant 0 : i32
    %c0_i32_1 = arith.constant 0 : i32
    return %c0_i32, %c0_i32_0 : i32, i32
  }
  func.func @transform_4(%arg0: i32) -> (i32, i32) {
    %c0_i32 = arith.constant 0 : i32
    %c0_i32_0 = arith.constant 0 : i32
    %c0_i32_1 = arith.constant 0 : i32
    return %c0_i32, %c0_i32_0 : i32, i32
  }
  func.func @transform_5(%arg0: i32) -> (i32, i32) {
    %c0_i32 = arith.constant 0 : i32
    %c0_i32_0 = arith.constant 0 : i32
    %c0_i32_1 = arith.constant 0 : i32
    return %c0_i32, %c0_i32_0 : i32, i32
  }
  func.func @transform_6(%arg0: i32) -> (i32, i32) {
    %c0_i32 = arith.constant 0 : i32
    %c0_i32_0 = arith.constant 0 : i32
    %c0_i32_1 = arith.constant 0 : i32
    return %c0_i32, %c0_i32_0 : i32, i32
  }
  func.func @transform_7(%arg0: i32) -> (i32, i32) {
    %c0_i32 = arith.constant 0 : i32
    %c0_i32_0 = arith.constant 0 : i32
    %c0_i32_1 = arith.constant 0 : i32
    return %c0_i32, %c0_i32_0 : i32, i32
  }
  func.func @transform_8(%arg0: i32) -> (i32, i32) {
    %c0_i32 = arith.constant 0 : i32
    %c0_i32_0 = arith.constant 0 : i32
    %c0_i32_1 = arith.constant 0 : i32
    return %c0_i32, %c0_i32_0 : i32, i32
  }
  func.func @transform_9(%arg0: i32) -> (i32, i32) {
    %c0_i32 = arith.constant 0 : i32
    %c0_i32_0 = arith.constant 0 : i32
    %c0_i32_1 = arith.constant 0 : i32
    return %c0_i32, %c0_i32_0 : i32, i32
  }
  func.func @transform_10(%arg0: i32) -> (i32, i32) {
    %c0_i32 = arith.constant 0 : i32
    %c0_i32_0 = arith.constant 0 : i32
    %c0_i32_1 = arith.constant 0 : i32
    return %c0_i32, %c0_i32_0 : i32, i32
  }
  func.func @transform_11(%arg0: i32) -> (i32, i32) {
    %c0_i32 = arith.constant 0 : i32
    %c0_i32_0 = arith.constant 0 : i32
    %c0_i32_1 = arith.constant 0 : i32
    return %c0_i32, %c0_i32_0 : i32, i32
  }
  func.func @transform_12(%arg0: i32) -> (i32, i32) {
    %c0_i32 = arith.constant 0 : i32
    %c0_i32_0 = arith.constant 0 : i32
    %c0_i32_1 = arith.constant 0 : i32
    return %c0_i32, %c0_i32_0 : i32, i32
  }
  func.func @transform_13(%arg0: i32) -> (i32, i32) {
    %c0_i32 = arith.constant 0 : i32
    %c0_i32_0 = arith.constant 0 : i32
    %c0_i32_1 = arith.constant 0 : i32
    return %c0_i32, %c0_i32_0 : i32, i32
  }
  func.func @transform_14(%arg0: i32) -> (i32, i32) {
    %c0_i32 = arith.constant 0 : i32
    %c0_i32_0 = arith.constant 0 : i32
    %c0_i32_1 = arith.constant 0 : i32
    return %c0_i32, %c0_i32_0 : i32, i32
  }
  func.func @transform_15(%arg0: i32) -> (i32, i32) {
    %c0_i32 = arith.constant 0 : i32
    %c0_i32_0 = arith.constant 0 : i32
    %c0_i32_1 = arith.constant 0 : i32
    return %c0_i32, %c0_i32_0 : i32, i32
  }
  func.func @transform_16(%arg0: i32) -> (i32, i32) {
    %c0_i32 = arith.constant 0 : i32
    %c0_i32_0 = arith.constant 0 : i32
    %c0_i32_1 = arith.constant 0 : i32
    return %c0_i32, %c0_i32_0 : i32, i32
  }
  func.func @transform_17(%arg0: i32) -> (i32, i32) {
    %c0_i32 = arith.constant 0 : i32
    %c0_i32_0 = arith.constant 0 : i32
    %c0_i32_1 = arith.constant 0 : i32
    return %c0_i32, %c0_i32_0 : i32, i32
  }
  func.func @transform_18(%arg0: i32) -> (i32, i32) {
    %c0_i32 = arith.constant 0 : i32
    %c0_i32_0 = arith.constant 0 : i32
    %c0_i32_1 = arith.constant 0 : i32
    return %c0_i32, %c0_i32_0 : i32, i32
  }
  func.func @transform_19(%arg0: i32) -> (i32, i32) {
    %c0_i32 = arith.constant 0 : i32
    %c0_i32_0 = arith.constant 0 : i32
    return %arg0, %c0_i32 : i32, i32
  }
}

</mosaic_0001>

<llo_original>
// kernel: heat_supply_mlp.1
$region0: #{heat_supply_mlp.1}
  #allocation0 [shape = 'u32[]', space=smem, size = 0x4, offset = 0x4, fixed_abs, tag = 'smem constant byte address 0x4 - core index']
  #allocation1 [shape = 'u32[144,128]{1,0:T(1,128)}', space=vmem, size = 0x12000, scoped, tag = 'internal scratch']
  %s0 = inlined_call_operand.vmem [shape: f32[8,128], index: 0, kind: input, shape index: {}]
  %s1 = inlined_call_operand.hbm [shape: bf16[128,512], index: 1, kind: input, shape index: {}]
  %s2 = inlined_call_operand.hbm [shape: f32[1,512], index: 2, kind: input, shape index: {}]
  %s3 = inlined_call_operand.hbm [shape: bf16[512,256], index: 3, kind: input, shape index: {}]
  %s4 = inlined_call_operand.vmem [shape: f32[1,256], index: 4, kind: input, shape index: {}]
  %s5 = inlined_call_operand.hbm [shape: bf16[256,128], index: 5, kind: input, shape index: {}]
  %s6 = inlined_call_operand.hbm [shape: f32[1,128], index: 6, kind: input, shape index: {}]
  %s7 = inlined_call_operand.hbm [shape: bf16[128,128], index: 7, kind: input, shape index: {}]
  %s8 = inlined_call_operand.hbm [shape: f32[1,128], index: 8, kind: input, shape index: {}]
  %s9 = inlined_call_operand.hbm [shape: bf16[128,128], index: 9, kind: input, shape index: {}]
  %s10 = inlined_call_operand.hbm [shape: f32[1,128], index: 10, kind: input, shape index: {}]
  %s11 = inlined_call_operand.hbm [shape: bf16[128,128], index: 11, kind: input, shape index: {}]
  %s12 = inlined_call_operand.hbm [shape: f32[1,128], index: 12, kind: input, shape index: {}]
  %s13 = inlined_call_operand.hbm [shape: bf16[128,128], index: 13, kind: input, shape index: {}]
  %s14 = inlined_call_operand.hbm [shape: f32[1,128], index: 14, kind: input, shape index: {}]
  %s15 = inlined_call_operand.hbm [shape: bf16[128,128], index: 15, kind: input, shape index: {}]
  %s16 = inlined_call_operand.hbm [shape: f32[1,128], index: 16, kind: input, shape index: {}]
  %s17 = inlined_call_operand.vmem [shape: bf16[128,128], index: 17, kind: input, shape index: {}]
  %s18 = inlined_call_operand.vmem [shape: f32[1,128], index: 18, kind: input, shape index: {}]
  %s19 = inlined_call_operand.vmem [shape: f32[8,128], index: 19, kind: output, shape index: {}]
  %s20 = sld [smem:[#allocation0]]
  $region146: #{heat_supply_mlp.1} parent=0
    _
  %s22 = ssub.s32 1, %s20
  %s23 = scalar_select 0, %s22, %s20
  $region1: #{heat_supply_mlp.1} parent=0
    #allocation2 [shape = 'u8[131072]{0}', space=vmem, size = 0x20000, scoped, tag = 'input window, operand 1, single buffered']
    #allocation3 [shape = 's32[1]{0}', space=sflag, size = 0x4, scoped, tag = 'scoped memory for heat_supply_mlp.1']
    #allocation4 [shape = 'u8[2048]{0}', space=vmem, size = 0x800, scoped, tag = 'input window, operand 2, single buffered']
    #allocation5 [shape = 's32[1]{0}', space=sflag, size = 0x4, scoped, tag = 'scoped memory for heat_supply_mlp.1']
    #allocation6 [shape = 'u8[262144]{0}', space=vmem, size = 0x40000, scoped, tag = 'input window, operand 3, single buffered']
    #allocation7 [shape = 'u8[65536]{0}', space=vmem, size = 0x10000, scoped, tag = 'input window, operand 5, single buffered']
    #allocation8 [shape = 's32[1]{0}', space=sflag, size = 0x4, scoped, tag = 'scoped memory for heat_supply_mlp.1']
    #allocation9 [shape = 'u8[512]{0}', space=vmem, size = 0x400, scoped, tag = 'input window, operand 6, single buffered']
    #allocation10 [shape = 'u8[32768]{0}', space=vmem, size = 0x8000, scoped, tag = 'input window, operand 7, single buffered']
    #allocation11 [shape = 's32[1]{0}', space=sflag, size = 0x4, scoped, tag = 'scoped memory for heat_supply_mlp.1']
    #allocation12 [shape = 'u8[512]{0}', space=vmem, size = 0x400, scoped, tag = 'input window, operand 8, single buffered']
    #allocation13 [shape = 'u8[32768]{0}', space=vmem, size = 0x8000, scoped, tag = 'input window, operand 9, single buffered']
    #allocation14 [shape = 's32[1]{0}', space=sflag, size = 0x4, scoped, tag = 'scoped memory for heat_supply_mlp.1']
    #allocation15 [shape = 'u8[512]{0}', space=vmem, size = 0x400, scoped, tag = 'input window, operand 10, single buffered']
    #allocation16 [shape = 'u8[32768]{0}', space=vmem, size = 0x8000, scoped, tag = 'input window, operand 11, single buffered']
    #allocation17 [shape = 's32[1]{0}', space=sflag, size = 0x4, scoped, tag = 'scoped memory for heat_supply_mlp.1']
    #allocation18 [shape = 'u8[512]{0}', space=vmem, size = 0x400, scoped, tag = 'input window, operand 12, single buffered']
    #allocation19 [shape = 'u8[32768]{0}', space=vmem, size = 0x8000, scoped, tag = 'input window, operand 13, single buffered']
    #allocation20 [shape = 's32[1]{0}', space=sflag, size = 0x4, scoped, tag = 'scoped memory for heat_supply_mlp.1']
    #allocation21 [shape = 'u8[512]{0}', space=vmem, size = 0x400, scoped, tag = 'input window, operand 14, single buffered']
    #allocation22 [shape = 'u8[32768]{0}', space=vmem, size = 0x8000, scoped, tag = 'input window, operand 15, single buffered']
    #allocation23 [shape = 's32[1]{0}', space=sflag, size = 0x4, scoped, tag = 'scoped memory for heat_supply_mlp.1']
    #allocation24 [shape = 'u8[512]{0}', space=vmem, size = 0x400, scoped, tag = 'input window, operand 16, single buffered']
    %24 = vsyncpa [#allocation3], 0
    %25 = vsyncpa [#allocation5], 0
    %26 = vsyncpa [#allocation8], 0
    %27 = vsyncpa [#allocation11], 0
    %28 = vsyncpa [#allocation14], 0
    %29 = vsyncpa [#allocation17], 0
    %30 = vsyncpa [#allocation20], 0
    %31 = vsyncpa [#allocation23], 0
    // Predicated region
    $region2: #{heat_supply_mlp.1} parent=1 // pred_check
      _
    $region3: #{heat_supply_mlp.1} parent=1 // pred_check_branch
      %33 = sbr.rel (0) target = $region5
    $region4: #{heat_supply_mlp.1} parent=1 // pred_region
      _
    $region5: #{heat_supply_mlp.1} parent=1 // pred_fallthru
      _
    // Predicated region
    $region6: #{heat_supply_mlp.1} parent=1 // pred_check
      _
    $region7: #{heat_supply_mlp.1} parent=1 // pred_check_branch
      %35 = sbr.rel (0) target = $region9
    $region8: #{heat_supply_mlp.1} parent=1 // pred_region
      %s37 = ssub.s32 4096, 4096
      %38 = vsyncadd [#allocation3], %s37
      %s39 = sshll.u32 [#allocation2], 4
      %s40 = int_to_ptr.vmem [resolvable:$true] %s39
      %45 = dma.hbm_to_vmem [thread:$0]  %s1, 4096, %s40, [#allocation3], 256, 256, 16
    $region9: #{heat_supply_mlp.1} parent=1 // pred_fallthru
      _
    // Predicated region
    $region10: #{heat_supply_mlp.1} parent=1 // pred_check
      _
    $region11: #{heat_supply_mlp.1} parent=1 // pred_check_branch
      %47 = sbr.rel (0) target = $region13
    $region12: #{heat_supply_mlp.1} parent=1 // pred_region
      %s49 = ssub.s32 64, 64
      %50 = vsyncadd [#allocation5], %s49
      %s52 = sshll.u32 [#allocation4], 4
      %s53 = int_to_ptr.vmem [resolvable:$true] %s52
      %55 = dma.hbm_to_vmem [thread:$0]  %s2, 64, %s53, [#allocation5]
    $region13: #{heat_supply_mlp.1} parent=1 // pred_fallthru
      _
    // Predicated region
    $region14: #{heat_supply_mlp.1} parent=1 // pred_check
      _
    $region15: #{heat_supply_mlp.1} parent=1 // pred_check_branch
      %57 = sbr.rel (0) target = $region17
    $region16: #{heat_supply_mlp.1} parent=1 // pred_region
      %s59 = ssub.s32 8192, 8192
      %60 = vsyncadd [#allocation5], %s59
      %s61 = sshll.u32 [#allocation6], 4
      %s62 = int_to_ptr.vmem [resolvable:$true] %s61
      %67 = dma.hbm_to_vmem [thread:$0]  %s3, 8192, %s62, [#allocation5], 128, 128, 8
    $region17: #{heat_supply_mlp.1} parent=1 // pred_fallthru
      _
    // Predicated region
    $region18: #{heat_supply_mlp.1} parent=1 // pred_check
      _
    $region19: #{heat_supply_mlp.1} parent=1 // pred_check_branch
      %69 = sbr.rel (0) target = $region21
    $region20: #{heat_supply_mlp.1} parent=1 // pred_region
      _
    $region21: #{heat_supply_mlp.1} parent=1 // pred_fallthru
      _
    // Predicated region
    $region22: #{heat_supply_mlp.1} parent=1 // pred_check
      _
    $region23: #{heat_supply_mlp.1} parent=1 // pred_check_branch
      %71 = sbr.rel (0) target = $region25
    $region24: #{heat_supply_mlp.1} parent=1 // pred_region
      %s73 = ssub.s32 2048, 2048
      %74 = vsyncadd [#allocation8], %s73
      %s75 = sshll.u32 [#allocation7], 4
      %s76 = int_to_ptr.vmem [resolvable:$true] %s75
      %81 = dma.hbm_to_vmem [thread:$0]  %s5, 2048, %s76, [#allocation8], 64, 64, 4
    $region25: #{heat_supply_mlp.1} parent=1 // pred_fallthru
      _
    // Predicated region
    $region26: #{heat_supply_mlp.1} parent=1 // pred_check
      _
    $region27: #{heat_supply_mlp.1} parent=1 // pred_check_branch
      %83 = sbr.rel (0) target = $region29
    $region28: #{heat_supply_mlp.1} parent=1 // pred_region
      %s85 = ssub.s32 16, 16
      %86 = vsyncadd [#allocation8], %s85
      %s88 = sshll.u32 [#allocation9], 4
      %s89 = int_to_ptr.vmem [resolvable:$true] %s88
      %91 = dma.hbm_to_vmem [thread:$0]  %s6, 16, %s89, [#allocation8]
    $region29: #{heat_supply_mlp.1} parent=1 // pred_fallthru
      _
    // Predicated region
    $region30: #{heat_supply_mlp.1} parent=1 // pred_check
      _
    $region31: #{heat_supply_mlp.1} parent=1 // pred_check_branch
      %93 = sbr.rel (0) target = $region33
    $region32: #{heat_supply_mlp.1} parent=1 // pred_region
      %s95 = ssub.s32 1024, 1024
      %96 = vsyncadd [#allocation11], %s95
      %s97 = sshll.u32 [#allocation10], 4
      %s98 = int_to_ptr.vmem [resolvable:$true] %s97
      %103 = dma.hbm_to_vmem [thread:$0]  %s7, 1024, %s98, [#allocation11], 64, 64, 4
    $region33: #{heat_supply_mlp.1} parent=1 // pred_fallthru
      _
    // Predicated region
    $region34: #{heat_supply_mlp.1} parent=1 // pred_check
      _
    $region35: #{heat_supply_mlp.1} parent=1 // pred_check_branch
      %105 = sbr.rel (0) target = $region37
    $region36: #{heat_supply_mlp.1} parent=1 // pred_region
      %s107 = ssub.s32 16, 16
      %108 = vsyncadd [#allocation11], %s107
      %s110 = sshll.u32 [#allocation12], 4
      %s111 = int_to_ptr.vmem [resolvable:$true] %s110
      %113 = dma.hbm_to_vmem [thread:$0]  %s8, 16, %s111, [#allocation11]
    $region37: #{heat_supply_mlp.1} parent=1 // pred_fallthru
      _
    // Predicated region
    $region38: #{heat_supply_mlp.1} parent=1 // pred_check
      _
    $region39: #{heat_supply_mlp.1} parent=1 // pred_check_branch
      %115 = sbr.rel (0) target = $region41
    $region40: #{heat_supply_mlp.1} parent=1 // pred_region
      %s117 = ssub.s32 1024, 1024
      %118 = vsyncadd [#allocation14], %s117
      %s119 = sshll.u32 [#allocation13], 4
      %s120 = int_to_ptr.vmem [resolvable:$true] %s119
      %125 = dma.hbm_to_vmem [thread:$0]  %s9, 1024, %s120, [#allocation14], 64, 64, 4
    $region41: #{heat_supply_mlp.1} parent=1 // pred_fallthru
      _
    // Predicated region
    $region42: #{heat_supply_mlp.1} parent=1 // pred_check
      _
    $region43: #{heat_supply_mlp.1} parent=1 // pred_check_branch
      %127 = sbr.rel (0) target = $region45
    $region44: #{heat_supply_mlp.1} parent=1 // pred_region
      %s129 = ssub.s32 16, 16
      %130 = vsyncadd [#allocation14], %s129
      %s132 = sshll.u32 [#allocation15], 4
      %s133 = int_to_ptr.vmem [resolvable:$true] %s132
      %135 = dma.hbm_to_vmem [thread:$0]  %s10, 16, %s133, [#allocation14]
    $region45: #{heat_supply_mlp.1} parent=1 // pred_fallthru
      _
    // Predicated region
    $region46: #{heat_supply_mlp.1} parent=1 // pred_check
      _
    $region47: #{heat_supply_mlp.1} parent=1 // pred_check_branch
      %137 = sbr.rel (0) target = $region49
    $region48: #{heat_supply_mlp.1} parent=1 // pred_region
      %s139 = ssub.s32 1024, 1024
      %140 = vsyncadd [#allocation17], %s139
      %s141 = sshll.u32 [#allocation16], 4
      %s142 = int_to_ptr.vmem [resolvable:$true] %s141
      %147 = dma.hbm_to_vmem [thread:$0]  %s11, 1024, %s142, [#allocation17], 64, 64, 4
    $region49: #{heat_supply_mlp.1} parent=1 // pred_fallthru
      _
    // Predicated region
    $region50: #{heat_supply_mlp.1} parent=1 // pred_check
      _
    $region51: #{heat_supply_mlp.1} parent=1 // pred_check_branch
      %149 = sbr.rel (0) target = $region53
    $region52: #{heat_supply_mlp.1} parent=1 // pred_region
      %s151 = ssub.s32 16, 16
      %152 = vsyncadd [#allocation17], %s151
      %s154 = sshll.u32 [#allocation18], 4
      %s155 = int_to_ptr.vmem [resolvable:$true] %s154
      %157 = dma.hbm_to_vmem [thread:$0]  %s12, 16, %s155, [#allocation17]
    $region53: #{heat_supply_mlp.1} parent=1 // pred_fallthru
      _
    // Predicated region
    $region54: #{heat_supply_mlp.1} parent=1 // pred_check
      _
    $region55: #{heat_supply_mlp.1} parent=1 // pred_check_branch
      %159 = sbr.rel (0) target = $region57
    $region56: #{heat_supply_mlp.1} parent=1 // pred_region
      %s161 = ssub.s32 1024, 1024
      %162 = vsyncadd [#allocation20], %s161
      %s163 = sshll.u32 [#allocation19], 4
      %s164 = int_to_ptr.vmem [resolvable:$true] %s163
      %169 = dma.hbm_to_vmem [thread:$0]  %s13, 1024, %s164, [#allocation20], 64, 64, 4
    $region57: #{heat_supply_mlp.1} parent=1 // pred_fallthru
      _
    // Predicated region
    $region58: #{heat_supply_mlp.1} parent=1 // pred_check
      _
    $region59: #{heat_supply_mlp.1} parent=1 // pred_check_branch
      %171 = sbr.rel (0) target = $region61
    $region60: #{heat_supply_mlp.1} parent=1 // pred_region
      %s173 = ssub.s32 16, 16
      %174 = vsyncadd [#allocation20], %s173
      %s176 = sshll.u32 [#allocation21], 4
      %s177 = int_to_ptr.vmem [resolvable:$true] %s176
      %179 = dma.hbm_to_vmem [thread:$0]  %s14, 16, %s177, [#allocation20]
    $region61: #{heat_supply_mlp.1} parent=1 // pred_fallthru
      _
    // Predicated region
    $region62: #{heat_supply_mlp.1} parent=1 // pred_check
      _
    $region63: #{heat_supply_mlp.1} parent=1 // pred_check_branch
      %181 = sbr.rel (0) target = $region65
    $region64: #{heat_supply_mlp.1} parent=1 // pred_region
      %s183 = ssub.s32 1024, 1024
      %184 = vsyncadd [#allocation23], %s183
      %s185 = sshll.u32 [#allocation22], 4
      %s186 = int_to_ptr.vmem [resolvable:$true] %s185
      %191 = dma.hbm_to_vmem [thread:$0]  %s15, 1024, %s186, [#allocation23], 64, 64, 4
    $region65: #{heat_supply_mlp.1} parent=1 // pred_fallthru
      _
    // Predicated region
    $region66: #{heat_supply_mlp.1} parent=1 // pred_check
      _
    $region67: #{heat_supply_mlp.1} parent=1 // pred_check_branch
      %193 = sbr.rel (0) target = $region69
    $region68: #{heat_supply_mlp.1} parent=1 // pred_region
      %s195 = ssub.s32 16, 16
      %196 = vsyncadd [#allocation23], %s195
      %s198 = sshll.u32 [#allocation24], 4
      %s199 = int_to_ptr.vmem [resolvable:$true] %s198
      %201 = dma.hbm_to_vmem [thread:$0]  %s16, 16, %s199, [#allocation23]
    $region69: #{heat_supply_mlp.1} parent=1 // pred_fallthru
      _
    // Predicated region
    $region70: #{heat_supply_mlp.1} parent=1 // pred_check
      _
    $region71: #{heat_supply_mlp.1} parent=1 // pred_check_branch
      %203 = sbr.rel (0) target = $region73
    $region72: #{heat_supply_mlp.1} parent=1 // pred_region
      _
    $region73: #{heat_supply_mlp.1} parent=1 // pred_fallthru
      _
    // Predicated region
    $region74: #{heat_supply_mlp.1} parent=1 // pred_check
      _
    $region75: #{heat_supply_mlp.1} parent=1 // pred_check_branch
      %205 = sbr.rel (0) target = $region77
    $region76: #{heat_supply_mlp.1} parent=1 // pred_region
      _
    $region77: #{heat_supply_mlp.1} parent=1 // pred_fallthru
      _
    // Predicated region
    $region78: #{heat_supply_mlp.1} parent=1 // pred_check
      _
    $region79: #{heat_supply_mlp.1} parent=1 // pred_check_branch
      %207 = sbr.rel (0) target = $region81
    $region80: #{heat_supply_mlp.1} parent=1 // pred_region
      %208 = dma.done [#allocation3], 4096
    $region81: #{heat_supply_mlp.1} parent=1 // pred_fallthru
      _
    // Predicated region
    $region82: #{heat_supply_mlp.1} parent=1 // pred_check
      _
    $region83: #{heat_supply_mlp.1} parent=1 // pred_check_branch
      %210 = sbr.rel (0) target = $region85
    $region84: #{heat_supply_mlp.1} parent=1 // pred_region
      %211 = dma.done [#allocation5], 64
    $region85: #{heat_supply_mlp.1} parent=1 // pred_fallthru
      _
    // Predicated region
    $region86: #{heat_supply_mlp.1} parent=1 // pred_check
      _
    $region87: #{heat_supply_mlp.1} parent=1 // pred_check_branch
      %213 = sbr.rel (0) target = $region89
    $region88: #{heat_supply_mlp.1} parent=1 // pred_region
      %214 = dma.done [#allocation5], 8192
    $region89: #{heat_supply_mlp.1} parent=1 // pred_fallthru
      _
    // Predicated region
    $region90: #{heat_supply_mlp.1} parent=1 // pred_check
      _
    $region91: #{heat_supply_mlp.1} parent=1 // pred_check_branch
      %216 = sbr.rel (0) target = $region93
    $region92: #{heat_supply_mlp.1} parent=1 // pred_region
      %217 = dma.done [#allocation8], 2048
    $region93: #{heat_supply_mlp.1} parent=1 // pred_fallthru
      _
    // Predicated region
    $region94: #{heat_supply_mlp.1} parent=1 // pred_check
      _
    $region95: #{heat_supply_mlp.1} parent=1 // pred_check_branch
      %219 = sbr.rel (0) target = $region97
    $region96: #{heat_supply_mlp.1} parent=1 // pred_region
      %220 = dma.done [#allocation8], 16
    $region97: #{heat_supply_mlp.1} parent=1 // pred_fallthru
      _
    // Predicated region
    $region98: #{heat_supply_mlp.1} parent=1 // pred_check
      _
    $region99: #{heat_supply_mlp.1} parent=1 // pred_check_branch
      %222 = sbr.rel (0) target = $region101
    $region100: #{heat_supply_mlp.1} parent=1 // pred_region
      %223 = dma.done [#allocation11], 1024
    $region101: #{heat_supply_mlp.1} parent=1 // pred_fallthru
      _
    // Predicated region
    $region102: #{heat_supply_mlp.1} parent=1 // pred_check
      _
    $region103: #{heat_supply_mlp.1} parent=1 // pred_check_branch
      %225 = sbr.rel (0) target = $region105
    $region104: #{heat_supply_mlp.1} parent=1 // pred_region
      %226 = dma.done [#allocation11], 16
    $region105: #{heat_supply_mlp.1} parent=1 // pred_fallthru
      _
    // Predicated region
    $region106: #{heat_supply_mlp.1} parent=1 // pred_check
      _
    $region107: #{heat_supply_mlp.1} parent=1 // pred_check_branch
      %228 = sbr.rel (0) target = $region109
    $region108: #{heat_supply_mlp.1} parent=1 // pred_region
      %229 = dma.done [#allocation14], 1024
    $region109: #{heat_supply_mlp.1} parent=1 // pred_fallthru
      _
    // Predicated region
    $region110: #{heat_supply_mlp.1} parent=1 // pred_check
      _
    $region111: #{heat_supply_mlp.1} parent=1 // pred_check_branch
      %231 = sbr.rel (0) target = $region113
    $region112: #{heat_supply_mlp.1} parent=1 // pred_region
      %232 = dma.done [#allocation14], 16
    $region113: #{heat_supply_mlp.1} parent=1 // pred_fallthru
      _
    // Predicated region
    $region114: #{heat_supply_mlp.1} parent=1 // pred_check
      _
    $region115: #{heat_supply_mlp.1} parent=1 // pred_check_branch
      %234 = sbr.rel (0) target = $region117
    $region116: #{heat_supply_mlp.1} parent=1 // pred_region
      %235 = dma.done [#allocation17], 1024
    $region117: #{heat_supply_mlp.1} parent=1 // pred_fallthru
      _
    // Predicated region
    $region118: #{heat_supply_mlp.1} parent=1 // pred_check
      _
    $region119: #{heat_supply_mlp.1} parent=1 // pred_check_branch
      %237 = sbr.rel (0) target = $region121
    $region120: #{heat_supply_mlp.1} parent=1 // pred_region
      %238 = dma.done [#allocation17], 16
    $region121: #{heat_supply_mlp.1} parent=1 // pred_fallthru
      _
    // Predicated region
    $region122: #{heat_supply_mlp.1} parent=1 // pred_check
      _
    $region123: #{heat_supply_mlp.1} parent=1 // pred_check_branch
      %240 = sbr.rel (0) target = $region125
    $region124: #{heat_supply_mlp.1} parent=1 // pred_region
      %241 = dma.done [#allocation20], 1024
    $region125: #{heat_supply_mlp.1} parent=1 // pred_fallthru
      _
    // Predicated region
    $region126: #{heat_supply_mlp.1} parent=1 // pred_check
      _
    $region127: #{heat_supply_mlp.1} parent=1 // pred_check_branch
      %243 = sbr.rel (0) target = $region129
    $region128: #{heat_supply_mlp.1} parent=1 // pred_region
      %244 = dma.done [#allocation20], 16
    $region129: #{heat_supply_mlp.1} parent=1 // pred_fallthru
      _
    // Predicated region
    $region130: #{heat_supply_mlp.1} parent=1 // pred_check
      _
    $region131: #{heat_supply_mlp.1} parent=1 // pred_check_branch
      %246 = sbr.rel (0) target = $region133
    $region132: #{heat_supply_mlp.1} parent=1 // pred_region
      %247 = dma.done [#allocation23], 1024
    $region133: #{heat_supply_mlp.1} parent=1 // pred_fallthru
      _
    // Predicated region
    $region134: #{heat_supply_mlp.1} parent=1 // pred_check
      _
    $region135: #{heat_supply_mlp.1} parent=1 // pred_check_branch
      %249 = sbr.rel (0) target = $region137
    $region136: #{heat_supply_mlp.1} parent=1 // pred_region
      %250 = dma.done [#allocation23], 16
    $region137: #{heat_supply_mlp.1} parent=1 // pred_fallthru
      _
    %v252 = vld [vmem:[%s0] sm:$0xff]
    %v253 = vld [vmem:[#allocation2] sm:$0xff]
    %v254 = vld [vmem:[#allocation2 + $0x8] sm:$0xff]
    %v255 = vld [vmem:[#allocation2 + $0x10] sm:$0xff]
    %v256 = vld [vmem:[#allocation2 + $0x18] sm:$0xff]
    %v257 = vld [vmem:[#allocation2 + $0x20] sm:$0xff]
    %v258 = vld [vmem:[#allocation2 + $0x28] sm:$0xff]
    %v259 = vld [vmem:[#allocation2 + $0x30] sm:$0xff]
    %v260 = vld [vmem:[#allocation2 + $0x38] sm:$0xff]
    %v261 = vld [vmem:[#allocation2 + $0x40] sm:$0xff]
    %v262 = vld [vmem:[#allocation2 + $0x48] sm:$0xff]
    %v263 = vld [vmem:[#allocation2 + $0x50] sm:$0xff]
    %v264 = vld [vmem:[#allocation2 + $0x58] sm:$0xff]
    %v265 = vld [vmem:[#allocation2 + $0x60] sm:$0xff]
    %v266 = vld [vmem:[#allocation2 + $0x68] sm:$0xff]
    %v267 = vld [vmem:[#allocation2 + $0x70] sm:$0xff]
    %v268 = vld [vmem:[#allocation2 + $0x78] sm:$0xff]
    %v269 = vld [vmem:[#allocation2 + $0x80] sm:$0xff]
    %v270 = vld [vmem:[#allocation2 + $0x88] sm:$0xff]
    %v271 = vld [vmem:[#allocation2 + $0x90] sm:$0xff]
    %v272 = vld [vmem:[#allocation2 + $0x98] sm:$0xff]
    %v273 = vld [vmem:[#allocation2 + $0xa0] sm:$0xff]
    %v274 = vld [vmem:[#allocation2 + $0xa8] sm:$0xff]
    %v275 = vld [vmem:[#allocation2 + $0xb0] sm:$0xff]
    %v276 = vld [vmem:[#allocation2 + $0xb8] sm:$0xff]
    %v277 = vld [vmem:[#allocation2 + $0xc0] sm:$0xff]
    %v278 = vld [vmem:[#allocation2 + $0xc8] sm:$0xff]
    %v279 = vld [vmem:[#allocation2 + $0xd0] sm:$0xff]
    %v280 = vld [vmem:[#allocation2 + $0xd8] sm:$0xff]
    %v281 = vld [vmem:[#allocation2 + $0xe0] sm:$0xff]
    %v282 = vld [vmem:[#allocation2 + $0xe8] sm:$0xff]
    %v283 = vld [vmem:[#allocation2 + $0xf0] sm:$0xff]
    %v284 = vld [vmem:[#allocation2 + $0xf8] sm:$0xff]
    %v285 = vld [vmem:[#allocation4] sm:$0xf]
    %v286 = vpack.c.bf16 %v252, %v252
    %v288 = vlaneseq
    %v289 = vshrl.u32 %v288, 7
    %v290 = vsub.s32 0, %v289
    %v291 = vrot.slane %v285, %v290
    %v292 = vlaneseq
    %v293 = vshrl.u32 %v292, 7
    %v294 = vsub.s32 1, %v293
    %v295 = vrot.slane %v285, %v294
    %v296 = vlaneseq
    %v297 = vshrl.u32 %v296, 7
    %v298 = vsub.s32 2, %v297
    %v299 = vrot.slane %v285, %v298
    %v300 = vlaneseq
    %v301 = vshrl.u32 %v300, 7
    %v302 = vsub.s32 3, %v301
    %v303 = vrot.slane %v285, %v302
    %v340 = vunpack.c.l.b16 %v253
    %v341 = vunpack.c.h.b16 %v253
    %v342 = vunpack.c.l.b16 %v254
    %v343 = vunpack.c.h.b16 %v254
    %v344 = vunpack.c.l.b16 %v255
    %v345 = vunpack.c.h.b16 %v255
    %v346 = vunpack.c.l.b16 %v256
    %v347 = vunpack.c.h.b16 %v256
    %v348 = vunpack.c.l.b16 %v257
    %v349 = vunpack.c.h.b16 %v257
    %v350 = vunpack.c.l.b16 %v258
    %v351 = vunpack.c.h.b16 %v258
    %v352 = vunpack.c.l.b16 %v259
    %v353 = vunpack.c.h.b16 %v259
    %v354 = vunpack.c.l.b16 %v260
    %v355 = vunpack.c.h.b16 %v260
    %v356 = vunpack.c.l.b16 %v261
    %v357 = vunpack.c.h.b16 %v261
    %v358 = vunpack.c.l.b16 %v262
    %v359 = vunpack.c.h.b16 %v262
    %v360 = vunpack.c.l.b16 %v263
    %v361 = vunpack.c.h.b16 %v263
    %v362 = vunpack.c.l.b16 %v264
    %v363 = vunpack.c.h.b16 %v264
    %v364 = vunpack.c.l.b16 %v265
    %v365 = vunpack.c.h.b16 %v265
    %v366 = vunpack.c.l.b16 %v266
    %v367 = vunpack.c.h.b16 %v266
    %v368 = vunpack.c.l.b16 %v267
    %v369 = vunpack.c.h.b16 %v267
    %v370 = vunpack.c.l.b16 %v268
    %v371 = vunpack.c.h.b16 %v268
    %v372 = vunpack.c.l.b16 %v269
    %v373 = vunpack.c.h.b16 %v269
    %v374 = vunpack.c.l.b16 %v270
    %v375 = vunpack.c.h.b16 %v270
    %v376 = vunpack.c.l.b16 %v271
    %v377 = vunpack.c.h.b16 %v271
    %v378 = vunpack.c.l.b16 %v272
    %v379 = vunpack.c.h.b16 %v272
    %v380 = vunpack.c.l.b16 %v273
    %v381 = vunpack.c.h.b16 %v273
    %v382 = vunpack.c.l.b16 %v274
    %v383 = vunpack.c.h.b16 %v274
    %v384 = vunpack.c.l.b16 %v275
    %v385 = vunpack.c.h.b16 %v275
    %v386 = vunpack.c.l.b16 %v276
    %v387 = vunpack.c.h.b16 %v276
    %v388 = vunpack.c.l.b16 %v277
    %v389 = vunpack.c.h.b16 %v277
    %v390 = vunpack.c.l.b16 %v278
    %v391 = vunpack.c.h.b16 %v278
    %v392 = vunpack.c.l.b16 %v279
    %v393 = vunpack.c.h.b16 %v279
    %v394 = vunpack.c.l.b16 %v280
    %v395 = vunpack.c.h.b16 %v280
    %v396 = vunpack.c.l.b16 %v281
    %v397 = vunpack.c.h.b16 %v281
    %v398 = vunpack.c.l.b16 %v282
    %v399 = vunpack.c.h.b16 %v282
    %v400 = vunpack.c.l.b16 %v283
    %v401 = vunpack.c.h.b16 %v283
    %v402 = vunpack.c.l.b16 %v284
    %v403 = vunpack.c.h.b16 %v284
    %v404 = vpack.c.b16 %v344, %v340
    %v405 = vpack.c.b16 %v345, %v341
    %v406 = vpack.c.b16 %v346, %v342
    %v407 = vpack.c.b16 %v347, %v343
    %v408 = vpack.c.b16 %v352, %v348
    %v409 = vpack.c.b16 %v353, %v349
    %v410 = vpack.c.b16 %v354, %v350
    %v411 = vpack.c.b16 %v355, %v351
    %v412 = vpack.c.b16 %v360, %v356
    %v413 = vpack.c.b16 %v361, %v357
    %v414 = vpack.c.b16 %v362, %v358
    %v415 = vpack.c.b16 %v363, %v359
    %v416 = vpack.c.b16 %v368, %v364
    %v417 = vpack.c.b16 %v369, %v365
    %v418 = vpack.c.b16 %v370, %v366
    %v419 = vpack.c.b16 %v371, %v367
    %v420 = vpack.c.b16 %v376, %v372
    %v421 = vpack.c.b16 %v377, %v373
    %v422 = vpack.c.b16 %v378, %v374
    %v423 = vpack.c.b16 %v379, %v375
    %v424 = vpack.c.b16 %v384, %v380
    %v425 = vpack.c.b16 %v385, %v381
    %v426 = vpack.c.b16 %v386, %v382
    %v427 = vpack.c.b16 %v387, %v383
    %v428 = vpack.c.b16 %v392, %v388
    %v429 = vpack.c.b16 %v393, %v389
    %v430 = vpack.c.b16 %v394, %v390
    %v431 = vpack.c.b16 %v395, %v391
    %v432 = vpack.c.b16 %v400, %v396
    %v433 = vpack.c.b16 %v401, %v397
    %v434 = vpack.c.b16 %v402, %v398
    %v435 = vpack.c.b16 %v403, %v399
    %468 = vmatprep.subr.bf16.mxu0 %v433
    %469 = vmatpush1.bf16.msra.mxu0 %v432
    %470 = vmatprep.subr.bf16.mxu0 %v429
    %471 = vmatpush1.bf16.msra.mxu0 %v428
    %472 = vmatprep.subr.bf16.mxu0 %v425
    %473 = vmatpush1.bf16.msra.mxu0 %v424
    %474 = vmatprep.subr.bf16.mxu0 %v421
    %475 = vmatpush1.bf16.msra.mxu0 %v420
    %476 = vmatprep.subr.bf16.mxu0 %v417
    %477 = vmatpush1.bf16.msra.mxu0 %v416
    %478 = vmatprep.subr.bf16.mxu0 %v413
    %479 = vmatpush1.bf16.msra.mxu0 %v412
    %480 = vmatprep.subr.bf16.mxu0 %v409
    %481 = vmatpush1.bf16.msra.mxu0 %v408
    %482 = vmatprep.subr.bf16.mxu0 %v405
    %483 = vmatpush1.bf16.msra.mxu0 %v404
    %484 = vmatprep.subr.bf16.mxu0 0
    %485 = vmatpush2.bf16.msra.mxu0 0
    %486 = vmatprep.subr.bf16.mxu0 0
    %487 = vmatpush2.bf16.msra.mxu0 0
    %488 = vmatprep.subr.bf16.mxu0 0
    %489 = vmatpush2.bf16.msra.mxu0 0
    %490 = vmatprep.subr.bf16.mxu0 0
    %491 = vmatpush2.bf16.msra.mxu0 0
    %492 = vmatprep.subr.bf16.mxu0 0
    %493 = vmatpush2.bf16.msra.mxu0 0
    %494 = vmatprep.subr.bf16.mxu0 0
    %495 = vmatpush2.bf16.msra.mxu0 0
    %496 = vmatprep.subr.bf16.mxu0 0
    %497 = vmatpush2.bf16.msra.mxu0 0
    %498 = vmatprep.subr.bf16.mxu0 0
    %499 = vmatpush2.bf16.msra.mxu0 0
    %500 = vmatprep.mubr.bf16.mxu0 0
    %501 = vmatmul.mubr.bf16.gmra.mxu0 %v286
    %v502 = vpop.f32.mrf.mxu0
    %v503 = vadd.f32 %v291, %v502
    %v504 = vpop.f32.mrf.mxu0
    %v505 = vadd.f32 %v295, %v504
    %v506 = vpop.f32.mrf.mxu0
    %v507 = vpop.f32.mrf.mxu0
    %508 = vdwg.mxu0
    %509 = vmatprep.subr.bf16.mxu0 %v435
    %510 = vmatpush1.bf16.msra.mxu0 %v434
    %511 = vmatprep.subr.bf16.mxu0 %v431
    %512 = vmatpush1.bf16.msra.mxu0 %v430
    %513 = vmatprep.subr.bf16.mxu0 %v427
    %514 = vmatpush1.bf16.msra.mxu0 %v426
    %515 = vmatprep.subr.bf16.mxu0 %v423
    %516 = vmatpush1.bf16.msra.mxu0 %v422
    %517 = vmatprep.subr.bf16.mxu0 %v419
    %518 = vmatpush1.bf16.msra.mxu0 %v418
    %519 = vmatprep.subr.bf16.mxu0 %v415
    %520 = vmatpush1.bf16.msra.mxu0 %v414
    %521 = vmatprep.subr.bf16.mxu0 %v411
    %522 = vmatpush1.bf16.msra.mxu0 %v410
    %523 = vmatprep.subr.bf16.mxu0 %v407
    %524 = vmatpush1.bf16.msra.mxu0 %v406
    %525 = vmatprep.subr.bf16.mxu0 0
    %526 = vmatpush2.bf16.msra.mxu0 0
    %527 = vmatprep.subr.bf16.mxu0 0
    %528 = vmatpush2.bf16.msra.mxu0 0
    %529 = vmatprep.subr.bf16.mxu0 0
    %530 = vmatpush2.bf16.msra.mxu0 0
    %531 = vmatprep.subr.bf16.mxu0 0
    %532 = vmatpush2.bf16.msra.mxu0 0
    %533 = vmatprep.subr.bf16.mxu0 0
    %534 = vmatpush2.bf16.msra.mxu0 0
    %535 = vmatprep.subr.bf16.mxu0 0
    %536 = vmatpush2.bf16.msra.mxu0 0
    %537 = vmatprep.subr.bf16.mxu0 0
    %538 = vmatpush2.bf16.msra.mxu0 0
    %539 = vmatprep.subr.bf16.mxu0 0
    %540 = vmatpush2.bf16.msra.mxu0 0
    %541 = vmatprep.mubr.bf16.mxu0 0
    %542 = vmatmul.mubr.bf16.gmra.mxu0 %v286
    %v543 = vpop.f32.mrf.mxu0
    %v544 = vadd.f32 %v299, %v543
    %v545 = vpop.f32.mrf.mxu0
    %v546 = vadd.f32 %v303, %v545
    %v547 = vpop.f32.mrf.mxu0
    %v548 = vpop.f32.mrf.mxu0
    %549 = vdwg.mxu0
    %v550 = vxor.u32 %v503, 2147483648
    %v551 = vxor.u32 %v505, 2147483648
    %v552 = vxor.u32 %v544, 2147483648
    %v553 = vxor.u32 %v546, 2147483648
    %v554 = vmul.f32 %v550, 1.442695
    %v555 = vpow.pop %v554
    %v556 = vmul.f32 %v551, 1.442695
    %v557 = vpow.pop %v556
    %v558 = vmul.f32 %v552, 1.442695
    %v559 = vpow.pop %v558
    %v560 = vmul.f32 %v553, 1.442695
    %v561 = vpow.pop %v560
    %v562 = vadd.f32 %v555, 1.0
    %v563 = vadd.f32 %v557, 1.0
    %v564 = vadd.f32 %v559, 1.0
    %v565 = vadd.f32 %v561, 1.0
    %v566 = vrcp.pop %v562
    %v567 = vmul.f32 1.0, %v566
    %v568 = vrcp.pop %v563
    %v569 = vmul.f32 1.0, %v568
    %v570 = vrcp.pop %v564
    %v571 = vmul.f32 1.0, %v570
    %v572 = vrcp.pop %v565
    %v573 = vmul.f32 1.0, %v572
    %v574 = vld [vmem:[#allocation6] sm:$0xff]
    %v575 = vld [vmem:[#allocation6 + $0x8] sm:$0xff]
    %v576 = vld [vmem:[#allocation6 + $0x10] sm:$0xff]
    %v577 = vld [vmem:[#allocation6 + $0x18] sm:$0xff]
    %v578 = vld [vmem:[#allocation6 + $0x20] sm:$0xff]
    %v579 = vld [vmem:[#allocation6 + $0x28] sm:$0xff]
    %v580 = vld [vmem:[#allocation6 + $0x30] sm:$0xff]
    %v581 = vld [vmem:[#allocation6 + $0x38] sm:$0xff]
    %v582 = vld [vmem:[#allocation6 + $0x40] sm:$0xff]
    %v583 = vld [vmem:[#allocation6 + $0x48] sm:$0xff]
    %v584 = vld [vmem:[#allocation6 + $0x50] sm:$0xff]
    %v585 = vld [vmem:[#allocation6 + $0x58] sm:$0xff]
    %v586 = vld [vmem:[#allocation6 + $0x60] sm:$0xff]
    %v587 = vld [vmem:[#allocation6 + $0x68] sm:$0xff]
    %v588 = vld [vmem:[#allocation6 + $0x70] sm:$0xff]
    %v589 = vld [vmem:[#allocation6 + $0x78] sm:$0xff]
    %v590 = vld [vmem:[#allocation6 + $0x80] sm:$0xff]
    %v591 = vld [vmem:[#allocation6 + $0x88] sm:$0xff]
    %v592 = vld [vmem:[#allocation6 + $0x90] sm:$0xff]
    %v593 = vld [vmem:[#allocation6 + $0x98] sm:$0xff]
    %v594 = vld [vmem:[#allocation6 + $0xa0] sm:$0xff]
    %v595 = vld [vmem:[#allocation6 + $0xa8] sm:$0xff]
    %v596 = vld [vmem:[#allocation6 + $0xb0] sm:$0xff]
    %v597 = vld [vmem:[#allocation6 + $0xb8] sm:$0xff]
    %v598 = vld [vmem:[#allocation6 + $0xc0] sm:$0xff]
    %v599 = vld [vmem:[#allocation6 + $0xc8] sm:$0xff]
    %v600 = vld [vmem:[#allocation6 + $0xd0] sm:$0xff]
    %v601 = vld [vmem:[#allocation6 + $0xd8] sm:$0xff]
    %v602 = vld [vmem:[#allocation6 + $0xe0] sm:$0xff]
    %v603 = vld [vmem:[#allocation6 + $0xe8] sm:$0xff]
    %v604 = vld [vmem:[#allocation6 + $0xf0] sm:$0xff]
    %v605 = vld [vmem:[#allocation6 + $0xf8] sm:$0xff]
    %v606 = vld [vmem:[#allocation6 + $0x100] sm:$0xff]
    %v607 = vld [vmem:[#allocation6 + $0x108] sm:$0xff]
    %v608 = vld [vmem:[#allocation6 + $0x110] sm:$0xff]
    %v609 = vld [vmem:[#allocation6 + $0x118] sm:$0xff]
    %v610 = vld [vmem:[#allocation6 + $0x120] sm:$0xff]
    %v611 = vld [vmem:[#allocation6 + $0x128] sm:$0xff]
    %v612 = vld [vmem:[#allocation6 + $0x130] sm:$0xff]
    %v613 = vld [vmem:[#allocation6 + $0x138] sm:$0xff]
    %v614 = vld [vmem:[#allocation6 + $0x140] sm:$0xff]
    %v615 = vld [vmem:[#allocation6 + $0x148] sm:$0xff]
    %v616 = vld [vmem:[#allocation6 + $0x150] sm:$0xff]
    %v617 = vld [vmem:[#allocation6 + $0x158] sm:$0xff]
    %v618 = vld [vmem:[#allocation6 + $0x160] sm:$0xff]
    %v619 = vld [vmem:[#allocation6 + $0x168] sm:$0xff]
    %v620 = vld [vmem:[#allocation6 + $0x170] sm:$0xff]
    %v621 = vld [vmem:[#allocation6 + $0x178] sm:$0xff]
    %v622 = vld [vmem:[#allocation6 + $0x180] sm:$0xff]
    %v623 = vld [vmem:[#allocation6 + $0x188] sm:$0xff]
    %v624 = vld [vmem:[#allocation6 + $0x190] sm:$0xff]
    %v625 = vld [vmem:[#allocation6 + $0x198] sm:$0xff]
    %v626 = vld [vmem:[#allocation6 + $0x1a0] sm:$0xff]
    %v627 = vld [vmem:[#allocation6 + $0x1a8] sm:$0xff]
    %v628 = vld [vmem:[#allocation6 + $0x1b0] sm:$0xff]
    %v629 = vld [vmem:[#allocation6 + $0x1b8] sm:$0xff]
    %v630 = vld [vmem:[#allocation6 + $0x1c0] sm:$0xff]
    %v631 = vld [vmem:[#allocation6 + $0x1c8] sm:$0xff]
    %v632 = vld [vmem:[#allocation6 + $0x1d0] sm:$0xff]
    %v633 = vld [vmem:[#allocation6 + $0x1d8] sm:$0xff]
    %v634 = vld [vmem:[#allocation6 + $0x1e0] sm:$0xff]
    %v635 = vld [vmem:[#allocation6 + $0x1e8] sm:$0xff]
    %v636 = vld [vmem:[#allocation6 + $0x1f0] sm:$0xff]
    %v637 = vld [vmem:[#allocation6 + $0x1f8] sm:$0xff]
    %v638 = vld [vmem:[%s4] sm:$0x3]
    %v639 = vpack.c.bf16 %v567, %v567
    %v640 = vpack.c.bf16 %v569, %v569
    %v641 = vpack.c.bf16 %v571, %v571
    %v642 = vpack.c.bf16 %v573, %v573
    %v644 = vlaneseq
    %v645 = vshrl.u32 %v644, 7
    %v646 = vsub.s32 0, %v645
    %v647 = vrot.slane %v638, %v646
    %v648 = vlaneseq
    %v649 = vshrl.u32 %v648, 7
    %v650 = vsub.s32 1, %v649
    %v651 = vrot.slane %v638, %v650
    %v718 = vunpack.c.l.b16 %v574
    %v719 = vunpack.c.h.b16 %v574
    %v720 = vunpack.c.l.b16 %v575
    %v721 = vunpack.c.h.b16 %v575
    %v722 = vunpack.c.l.b16 %v576
    %v723 = vunpack.c.h.b16 %v576
    %v724 = vunpack.c.l.b16 %v577
    %v725 = vunpack.c.h.b16 %v577
    %v726 = vunpack.c.l.b16 %v578
    %v727 = vunpack.c.h.b16 %v578
    %v728 = vunpack.c.l.b16 %v579
    %v729 = vunpack.c.h.b16 %v579
    %v730 = vunpack.c.l.b16 %v580
    %v731 = vunpack.c.h.b16 %v580
    %v732 = vunpack.c.l.b16 %v581
    %v733 = vunpack.c.h.b16 %v581
    %v734 = vunpack.c.l.b16 %v582
    %v735 = vunpack.c.h.b16 %v582
    %v736 = vunpack.c.l.b16 %v583
    %v737 = vunpack.c.h.b16 %v583
    %v738 = vunpack.c.l.b16 %v584
    %v739 = vunpack.c.h.b16 %v584
    %v740 = vunpack.c.l.b16 %v585
    %v741 = vunpack.c.h.b16 %v585
    %v742 = vunpack.c.l.b16 %v586
    %v743 = vunpack.c.h.b16 %v586
    %v744 = vunpack.c.l.b16 %v587
    %v745 = vunpack.c.h.b16 %v587
    %v746 = vunpack.c.l.b16 %v588
    %v747 = vunpack.c.h.b16 %v588
    %v748 = vunpack.c.l.b16 %v589
    %v749 = vunpack.c.h.b16 %v589
    %v750 = vunpack.c.l.b16 %v590
    %v751 = vunpack.c.h.b16 %v590
    %v752 = vunpack.c.l.b16 %v591
    %v753 = vunpack.c.h.b16 %v591
    %v754 = vunpack.c.l.b16 %v592
    %v755 = vunpack.c.h.b16 %v592
    %v756 = vunpack.c.l.b16 %v593
    %v757 = vunpack.c.h.b16 %v593
    %v758 = vunpack.c.l.b16 %v594
    %v759 = vunpack.c.h.b16 %v594
    %v760 = vunpack.c.l.b16 %v595
    %v761 = vunpack.c.h.b16 %v595
    %v762 = vunpack.c.l.b16 %v596
    %v763 = vunpack.c.h.b16 %v596
    %v764 = vunpack.c.l.b16 %v597
    %v765 = vunpack.c.h.b16 %v597
    %v766 = vunpack.c.l.b16 %v598
    %v767 = vunpack.c.h.b16 %v598
    %v768 = vunpack.c.l.b16 %v599
    %v769 = vunpack.c.h.b16 %v599
    %v770 = vunpack.c.l.b16 %v600
    %v771 = vunpack.c.h.b16 %v600
    %v772 = vunpack.c.l.b16 %v601
    %v773 = vunpack.c.h.b16 %v601
    %v774 = vunpack.c.l.b16 %v602
    %v775 = vunpack.c.h.b16 %v602
    %v776 = vunpack.c.l.b16 %v603
    %v777 = vunpack.c.h.b16 %v603
    %v778 = vunpack.c.l.b16 %v604
    %v779 = vunpack.c.h.b16 %v604
    %v780 = vunpack.c.l.b16 %v605
    %v781 = vunpack.c.h.b16 %v605
    %v782 = vunpack.c.l.b16 %v606
    %v783 = vunpack.c.h.b16 %v606
    %v784 = vunpack.c.l.b16 %v607
    %v785 = vunpack.c.h.b16 %v607
    %v786 = vunpack.c.l.b16 %v608
    %v787 = vunpack.c.h.b16 %v608
    %v788 = vunpack.c.l.b16 %v609
    %v789 = vunpack.c.h.b16 %v609
    %v790 = vunpack.c.l.b16 %v610
    %v791 = vunpack.c.h.b16 %v610
    %v792 = vunpack.c.l.b16 %v611
    %v793 = vunpack.c.h.b16 %v611
    %v794 = vunpack.c.l.b16 %v612
    %v795 = vunpack.c.h.b16 %v612
    %v796 = vunpack.c.l.b16 %v613
    %v797 = vunpack.c.h.b16 %v613
    %v798 = vunpack.c.l.b16 %v614
    %v799 = vunpack.c.h.b16 %v614
    %v800 = vunpack.c.l.b16 %v615
    %v801 = vunpack.c.h.b16 %v615
    %v802 = vunpack.c.l.b16 %v616
    %v803 = vunpack.c.h.b16 %v616
    %v804 = vunpack.c.l.b16 %v617
    %v805 = vunpack.c.h.b16 %v617
    %v806 = vunpack.c.l.b16 %v618
    %v807 = vunpack.c.h.b16 %v618
    %v808 = vunpack.c.l.b16 %v619
    %v809 = vunpack.c.h.b16 %v619
    %v810 = vunpack.c.l.b16 %v620
    %v811 = vunpack.c.h.b16 %v620
    %v812 = vunpack.c.l.b16 %v621
    %v813 = vunpack.c.h.b16 %v621
    %v814 = vunpack.c.l.b16 %v622
    %v815 = vunpack.c.h.b16 %v622
    %v816 = vunpack.c.l.b16 %v623
    %v817 = vunpack.c.h.b16 %v623
    %v818 = vunpack.c.l.b16 %v624
    %v819 = vunpack.c.h.b16 %v624
    %v820 = vunpack.c.l.b16 %v625
    %v821 = vunpack.c.h.b16 %v625
    %v822 = vunpack.c.l.b16 %v626
    %v823 = vunpack.c.h.b16 %v626
    %v824 = vunpack.c.l.b16 %v627
    %v825 = vunpack.c.h.b16 %v627
    %v826 = vunpack.c.l.b16 %v628
    %v827 = vunpack.c.h.b16 %v628
    %v828 = vunpack.c.l.b16 %v629
    %v829 = vunpack.c.h.b16 %v629
    %v830 = vunpack.c.l.b16 %v630
    %v831 = vunpack.c.h.b16 %v630
    %v832 = vunpack.c.l.b16 %v631
    %v833 = vunpack.c.h.b16 %v631
    %v834 = vunpack.c.l.b16 %v632
    %v835 = vunpack.c.h.b16 %v632
    %v836 = vunpack.c.l.b16 %v633
    %v837 = vunpack.c.h.b16 %v633
    %v838 = vunpack.c.l.b16 %v634
    %v839 = vunpack.c.h.b16 %v634
    %v840 = vunpack.c.l.b16 %v635
    %v841 = vunpack.c.h.b16 %v635
    %v842 = vunpack.c.l.b16 %v636
    %v843 = vunpack.c.h.b16 %v636
    %v844 = vunpack.c.l.b16 %v637
    %v845 = vunpack.c.h.b16 %v637
    %v846 = vpack.c.b16 %v720, %v718
    %v847 = vpack.c.b16 %v721, %v719
    %v848 = vpack.c.b16 %v724, %v722
    %v849 = vpack.c.b16 %v725, %v723
    %v850 = vpack.c.b16 %v728, %v726
    %v851 = vpack.c.b16 %v729, %v727
    %v852 = vpack.c.b16 %v732, %v730
    %v853 = vpack.c.b16 %v733, %v731
    %v854 = vpack.c.b16 %v736, %v734
    %v855 = vpack.c.b16 %v737, %v735
    %v856 = vpack.c.b16 %v740, %v738
    %v857 = vpack.c.b16 %v741, %v739
    %v858 = vpack.c.b16 %v744, %v742
    %v859 = vpack.c.b16 %v745, %v743
    %v860 = vpack.c.b16 %v748, %v746
    %v861 = vpack.c.b16 %v749, %v747
    %v862 = vpack.c.b16 %v752, %v750
    %v863 = vpack.c.b16 %v753, %v751
    %v864 = vpack.c.b16 %v756, %v754
    %v865 = vpack.c.b16 %v757, %v755
    %v866 = vpack.c.b16 %v760, %v758
    %v867 = vpack.c.b16 %v761, %v759
    %v868 = vpack.c.b16 %v764, %v762
    %v869 = vpack.c.b16 %v765, %v763
    %v870 = vpack.c.b16 %v768, %v766
    %v871 = vpack.c.b16 %v769, %v767
    %v872 = vpack.c.b16 %v772, %v770
    %v873 = vpack.c.b16 %v773, %v771
    %v874 = vpack.c.b16 %v776, %v774
    %v875 = vpack.c.b16 %v777, %v775
    %v876 = vpack.c.b16 %v780, %v778
    %v877 = vpack.c.b16 %v781, %v779
    %v878 = vpack.c.b16 %v784, %v782
    %v879 = vpack.c.b16 %v785, %v783
    %v880 = vpack.c.b16 %v788, %v786
    %v881 = vpack.c.b16 %v789, %v787
    %v882 = vpack.c.b16 %v792, %v790
    %v883 = vpack.c.b16 %v793, %v791
    %v884 = vpack.c.b16 %v796, %v794
    %v885 = vpack.c.b16 %v797, %v795
    %v886 = vpack.c.b16 %v800, %v798
    %v887 = vpack.c.b16 %v801, %v799
    %v888 = vpack.c.b16 %v804, %v802
    %v889 = vpack.c.b16 %v805, %v803
    %v890 = vpack.c.b16 %v808, %v806
    %v891 = vpack.c.b16 %v809, %v807
    %v892 = vpack.c.b16 %v812, %v810
    %v893 = vpack.c.b16 %v813, %v811
    %v894 = vpack.c.b16 %v816, %v814
    %v895 = vpack.c.b16 %v817, %v815
    %v896 = vpack.c.b16 %v820, %v818
    %v897 = vpack.c.b16 %v821, %v819
    %v898 = vpack.c.b16 %v824, %v822
    %v899 = vpack.c.b16 %v825, %v823
    %v900 = vpack.c.b16 %v828, %v826
    %v901 = vpack.c.b16 %v829, %v827
    %v902 = vpack.c.b16 %v832, %v830
    %v903 = vpack.c.b16 %v833, %v831
    %v904 = vpack.c.b16 %v836, %v834
    %v905 = vpack.c.b16 %v837, %v835
    %v906 = vpack.c.b16 %v840, %v838
    %v907 = vpack.c.b16 %v841, %v839
    %v908 = vpack.c.b16 %v844, %v842
    %v909 = vpack.c.b16 %v845, %v843
    %974 = vmatprep.subr.bf16.mxu0 %v861
    %975 = vmatpush1.bf16.msra.mxu0 %v860
    %976 = vmatprep.subr.bf16.mxu0 %v859
    %977 = vmatpush1.bf16.msra.mxu0 %v858
    %978 = vmatprep.subr.bf16.mxu0 %v857
    %979 = vmatpush1.bf16.msra.mxu0 %v856
    %980 = vmatprep.subr.bf16.mxu0 %v855
    %981 = vmatpush1.bf16.msra.mxu0 %v854
    %982 = vmatprep.subr.bf16.mxu0 %v853
    %983 = vmatpush1.bf16.msra.mxu0 %v852
    %984 = vmatprep.subr.bf16.mxu0 %v851
    %985 = vmatpush1.bf16.msra.mxu0 %v850
    %986 = vmatprep.subr.bf16.mxu0 %v849
    %987 = vmatpush1.bf16.msra.mxu0 %v848
    %988 = vmatprep.subr.bf16.mxu0 %v847
    %989 = vmatpush1.bf16.msra.mxu0 %v846
    %990 = vmatprep.subr.bf16.mxu0 %v877
    %991 = vmatpush2.bf16.msra.mxu0 %v876
    %992 = vmatprep.subr.bf16.mxu0 %v875
    %993 = vmatpush2.bf16.msra.mxu0 %v874
    %994 = vmatprep.subr.bf16.mxu0 %v873
    %995 = vmatpush2.bf16.msra.mxu0 %v872
    %996 = vmatprep.subr.bf16.mxu0 %v871
    %997 = vmatpush2.bf16.msra.mxu0 %v870
    %998 = vmatprep.subr.bf16.mxu0 %v869
    %999 = vmatpush2.bf16.msra.mxu0 %v868
    %1000 = vmatprep.subr.bf16.mxu0 %v867
    %1001 = vmatpush2.bf16.msra.mxu0 %v866
    %1002 = vmatprep.subr.bf16.mxu0 %v865
    %1003 = vmatpush2.bf16.msra.mxu0 %v864
    %1004 = vmatprep.subr.bf16.mxu0 %v863
    %1005 = vmatpush2.bf16.msra.mxu0 %v862
    %1006 = vmatprep.mubr.bf16.mxu0 %v640
    %1007 = vmatmul.mubr.bf16.gmra.mxu0 %v639
    %v1008 = vpop.f32.mrf.mxu0
    %v1009 = vadd.f32 %v647, %v1008
    %v1010 = vpop.f32.mrf.mxu0
    %v1011 = vadd.f32 %v651, %v1010
    %v1012 = vpop.f32.mrf.mxu0
    %v1013 = vpop.f32.mrf.mxu0
    %1014 = vdwg.mxu0
    %1015 = vmatprep.subr.bf16.mxu0 %v893
    %1016 = vmatpush1.bf16.msra.mxu0 %v892
    %1017 = vmatprep.subr.bf16.mxu0 %v891
    %1018 = vmatpush1.bf16.msra.mxu0 %v890
    %1019 = vmatprep.subr.bf16.mxu0 %v889
    %1020 = vmatpush1.bf16.msra.mxu0 %v888
    %1021 = vmatprep.subr.bf16.mxu0 %v887
    %1022 = vmatpush1.bf16.msra.mxu0 %v886
    %1023 = vmatprep.subr.bf16.mxu0 %v885
    %1024 = vmatpush1.bf16.msra.mxu0 %v884
    %1025 = vmatprep.subr.bf16.mxu0 %v883
    %1026 = vmatpush1.bf16.msra.mxu0 %v882
    %1027 = vmatprep.subr.bf16.mxu0 %v881
    %1028 = vmatpush1.bf16.msra.mxu0 %v880
    %1029 = vmatprep.subr.bf16.mxu0 %v879
    %1030 = vmatpush1.bf16.msra.mxu0 %v878
    %1031 = vmatprep.subr.bf16.mxu0 %v909
    %1032 = vmatpush2.bf16.msra.mxu0 %v908
    %1033 = vmatprep.subr.bf16.mxu0 %v907
    %1034 = vmatpush2.bf16.msra.mxu0 %v906
    %1035 = vmatprep.subr.bf16.mxu0 %v905
    %1036 = vmatpush2.bf16.msra.mxu0 %v904
    %1037 = vmatprep.subr.bf16.mxu0 %v903
    %1038 = vmatpush2.bf16.msra.mxu0 %v902
    %1039 = vmatprep.subr.bf16.mxu0 %v901
    %1040 = vmatpush2.bf16.msra.mxu0 %v900
    %1041 = vmatprep.subr.bf16.mxu0 %v899
    %1042 = vmatpush2.bf16.msra.mxu0 %v898
    %1043 = vmatprep.subr.bf16.mxu0 %v897
    %1044 = vmatpush2.bf16.msra.mxu0 %v896
    %1045 = vmatprep.subr.bf16.mxu0 %v895
    %1046 = vmatpush2.bf16.msra.mxu0 %v894
    %1047 = vmatprep.mubr.bf16.mxu0 %v642
    %1048 = vmatmul.mubr.bf16.gmra.mxu0 %v641
    %v1049 = vpop.f32.mrf.mxu0
    %v1050 = vadd.f32 %v1009, %v1049
    %v1051 = vpop.f32.mrf.mxu0
    %v1052 = vadd.f32 %v1011, %v1051
    %v1053 = vpop.f32.mrf.mxu0
    %v1054 = vpop.f32.mrf.mxu0
    %1055 = vdwg.mxu0
    %v1056 = vxor.u32 %v1050, 2147483648
    %v1057 = vxor.u32 %v1052, 2147483648
    %v1058 = vmul.f32 %v1056, 1.442695
    %v1059 = vpow.pop %v1058
    %v1060 = vmul.f32 %v1057, 1.442695
    %v1061 = vpow.pop %v1060
    %v1062 = vadd.f32 %v1059, 1.0
    %v1063 = vadd.f32 %v1061, 1.0
    %v1064 = vrcp.pop %v1062
    %v1065 = vmul.f32 1.0, %v1064
    %v1066 = vrcp.pop %v1063
    %v1067 = vmul.f32 1.0, %v1066
    %v1068 = vld [vmem:[#allocation7] sm:$0xf]
    %v1069 = vld [vmem:[#allocation7 + $0x4] sm:$0xf]
    %v1070 = vld [vmem:[#allocation7 + $0x8] sm:$0xf]
    %v1071 = vld [vmem:[#allocation7 + $0xc] sm:$0xf]
    %v1072 = vld [vmem:[#allocation7 + $0x10] sm:$0xf]
    %v1073 = vld [vmem:[#allocation7 + $0x14] sm:$0xf]
    %v1074 = vld [vmem:[#allocation7 + $0x18] sm:$0xf]
    %v1075 = vld [vmem:[#allocation7 + $0x1c] sm:$0xf]
    %v1076 = vld [vmem:[#allocation7 + $0x20] sm:$0xf]
    %v1077 = vld [vmem:[#allocation7 + $0x24] sm:$0xf]
    %v1078 = vld [vmem:[#allocation7 + $0x28] sm:$0xf]
    %v1079 = vld [vmem:[#allocation7 + $0x2c] sm:$0xf]
    %v1080 = vld [vmem:[#allocation7 + $0x30] sm:$0xf]
    %v1081 = vld [vmem:[#allocation7 + $0x34] sm:$0xf]
    %v1082 = vld [vmem:[#allocation7 + $0x38] sm:$0xf]
    %v1083 = vld [vmem:[#allocation7 + $0x3c] sm:$0xf]
    %v1084 = vld [vmem:[#allocation7 + $0x40] sm:$0xf]
    %v1085 = vld [vmem:[#allocation7 + $0x44] sm:$0xf]
    %v1086 = vld [vmem:[#allocation7 + $0x48] sm:$0xf]
    %v1087 = vld [vmem:[#allocation7 + $0x4c] sm:$0xf]
    %v1088 = vld [vmem:[#allocation7 + $0x50] sm:$0xf]
    %v1089 = vld [vmem:[#allocation7 + $0x54] sm:$0xf]
    %v1090 = vld [vmem:[#allocation7 + $0x58] sm:$0xf]
    %v1091 = vld [vmem:[#allocation7 + $0x5c] sm:$0xf]
    %v1092 = vld [vmem:[#allocation7 + $0x60] sm:$0xf]
    %v1093 = vld [vmem:[#allocation7 + $0x64] sm:$0xf]
    %v1094 = vld [vmem:[#allocation7 + $0x68] sm:$0xf]
    %v1095 = vld [vmem:[#allocation7 + $0x6c] sm:$0xf]
    %v1096 = vld [vmem:[#allocation7 + $0x70] sm:$0xf]
    %v1097 = vld [vmem:[#allocation7 + $0x74] sm:$0xf]
    %v1098 = vld [vmem:[#allocation7 + $0x78] sm:$0xf]
    %v1099 = vld [vmem:[#allocation7 + $0x7c] sm:$0xf]
    %v1100 = vld [vmem:[#allocation9] sm:$0x1]
    %v1101 = vpack.c.bf16 %v1065, %v1065
    %v1102 = vpack.c.bf16 %v1067, %v1067
    %v1104 = vlaneseq
    %v1105 = vshrl.u32 %v1104, 7
    %v1106 = vsub.s32 0, %v1105
    %v1107 = vrot.slane %v1100, %v1106
    %v1141 = vunpack.c.l.b16 %v1068
    %v1142 = vunpack.c.l.b16 %v1069
    %v1143 = vunpack.c.l.b16 %v1070
    %v1144 = vunpack.c.l.b16 %v1071
    %v1145 = vunpack.c.l.b16 %v1072
    %v1146 = vunpack.c.l.b16 %v1073
    %v1147 = vunpack.c.l.b16 %v1074
    %v1148 = vunpack.c.l.b16 %v1075
    %v1149 = vunpack.c.l.b16 %v1076
    %v1150 = vunpack.c.l.b16 %v1077
    %v1151 = vunpack.c.l.b16 %v1078
    %v1152 = vunpack.c.l.b16 %v1079
    %v1153 = vunpack.c.l.b16 %v1080
    %v1154 = vunpack.c.l.b16 %v1081
    %v1155 = vunpack.c.l.b16 %v1082
    %v1156 = vunpack.c.l.b16 %v1083
    %v1157 = vunpack.c.l.b16 %v1084
    %v1158 = vunpack.c.l.b16 %v1085
    %v1159 = vunpack.c.l.b16 %v1086
    %v1160 = vunpack.c.l.b16 %v1087
    %v1161 = vunpack.c.l.b16 %v1088
    %v1162 = vunpack.c.l.b16 %v1089
    %v1163 = vunpack.c.l.b16 %v1090
    %v1164 = vunpack.c.l.b16 %v1091
    %v1165 = vunpack.c.l.b16 %v1092
    %v1166 = vunpack.c.l.b16 %v1093
    %v1167 = vunpack.c.l.b16 %v1094
    %v1168 = vunpack.c.l.b16 %v1095
    %v1169 = vunpack.c.l.b16 %v1096
    %v1170 = vunpack.c.l.b16 %v1097
    %v1171 = vunpack.c.l.b16 %v1098
    %v1172 = vunpack.c.l.b16 %v1099
    %v1173 = vpack.c.b16 %v1142, %v1141
    %v1174 = vpack.c.b16 %v1144, %v1143
    %v1175 = vpack.c.b16 %v1146, %v1145
    %v1176 = vpack.c.b16 %v1148, %v1147
    %v1177 = vpack.c.b16 %v1150, %v1149
    %v1178 = vpack.c.b16 %v1152, %v1151
    %v1179 = vpack.c.b16 %v1154, %v1153
    %v1180 = vpack.c.b16 %v1156, %v1155
    %v1181 = vpack.c.b16 %v1158, %v1157
    %v1182 = vpack.c.b16 %v1160, %v1159
    %v1183 = vpack.c.b16 %v1162, %v1161
    %v1184 = vpack.c.b16 %v1164, %v1163
    %v1185 = vpack.c.b16 %v1166, %v1165
    %v1186 = vpack.c.b16 %v1168, %v1167
    %v1187 = vpack.c.b16 %v1170, %v1169
    %v1188 = vpack.c.b16 %v1172, %v1171
    %1205 = vmatprep.subr.bf16.mxu0 0
    %1206 = vmatpush1.bf16.msra.mxu0 %v1180
    %1207 = vmatprep.subr.bf16.mxu0 0
    %1208 = vmatpush1.bf16.msra.mxu0 %v1179
    %1209 = vmatprep.subr.bf16.mxu0 0
    %1210 = vmatpush1.bf16.msra.mxu0 %v1178
    %1211 = vmatprep.subr.bf16.mxu0 0
    %1212 = vmatpush1.bf16.msra.mxu0 %v1177
    %1213 = vmatprep.subr.bf16.mxu0 0
    %1214 = vmatpush1.bf16.msra.mxu0 %v1176
    %1215 = vmatprep.subr.bf16.mxu0 0
    %1216 = vmatpush1.bf16.msra.mxu0 %v1175
    %1217 = vmatprep.subr.bf16.mxu0 0
    %1218 = vmatpush1.bf16.msra.mxu0 %v1174
    %1219 = vmatprep.subr.bf16.mxu0 0
    %1220 = vmatpush1.bf16.msra.mxu0 %v1173
    %1221 = vmatprep.subr.bf16.mxu0 0
    %1222 = vmatpush2.bf16.msra.mxu0 %v1188
    %1223 = vmatprep.subr.bf16.mxu0 0
    %1224 = vmatpush2.bf16.msra.mxu0 %v1187
    %1225 = vmatprep.subr.bf16.mxu0 0
    %1226 = vmatpush2.bf16.msra.mxu0 %v1186
    %1227 = vmatprep.subr.bf16.mxu0 0
    %1228 = vmatpush2.bf16.msra.mxu0 %v1185
    %1229 = vmatprep.subr.bf16.mxu0 0
    %1230 = vmatpush2.bf16.msra.mxu0 %v1184
    %1231 = vmatprep.subr.bf16.mxu0 0
    %1232 = vmatpush2.bf16.msra.mxu0 %v1183
    %1233 = vmatprep.subr.bf16.mxu0 0
    %1234 = vmatpush2.bf16.msra.mxu0 %v1182
    %1235 = vmatprep.subr.bf16.mxu0 0
    %1236 = vmatpush2.bf16.msra.mxu0 %v1181
    %1237 = vmatprep.mubr.bf16.mxu0 %v1102
    %1238 = vmatmul.mubr.bf16.gmra.mxu0 %v1101
    %v1239 = vpop.f32.mrf.mxu0
    %v1240 = vadd.f32 %v1107, %v1239
    %v1241 = vpop.f32.mrf.mxu0
    %v1242 = vpop.f32.mrf.mxu0
    %v1243 = vpop.f32.mrf.mxu0
    %1244 = vdwg.mxu0
    %v1245 = vxor.u32 %v1240, 2147483648
    %v1246 = vmul.f32 %v1245, 1.442695
    %v1247 = vpow.pop %v1246
    %v1248 = vadd.f32 %v1247, 1.0
    %v1249 = vrcp.pop %v1248
    %v1250 = vmul.f32 1.0, %v1249
    %v1251 = vld [vmem:[#allocation10] sm:$0xf]
    %v1252 = vld [vmem:[#allocation10 + $0x4] sm:$0xf]
    %v1253 = vld [vmem:[#allocation10 + $0x8] sm:$0xf]
    %v1254 = vld [vmem:[#allocation10 + $0xc] sm:$0xf]
    %v1255 = vld [vmem:[#allocation10 + $0x10] sm:$0xf]
    %v1256 = vld [vmem:[#allocation10 + $0x14] sm:$0xf]
    %v1257 = vld [vmem:[#allocation10 + $0x18] sm:$0xf]
    %v1258 = vld [vmem:[#allocation10 + $0x1c] sm:$0xf]
    %v1259 = vld [vmem:[#allocation10 + $0x20] sm:$0xf]
    %v1260 = vld [vmem:[#allocation10 + $0x24] sm:$0xf]
    %v1261 = vld [vmem:[#allocation10 + $0x28] sm:$0xf]
    %v1262 = vld [vmem:[#allocation10 + $0x2c] sm:$0xf]
    %v1263 = vld [vmem:[#allocation10 + $0x30] sm:$0xf]
    %v1264 = vld [vmem:[#allocation10 + $0x34] sm:$0xf]
    %v1265 = vld [vmem:[#allocation10 + $0x38] sm:$0xf]
    %v1266 = vld [vmem:[#allocation10 + $0x3c] sm:$0xf]
    %v1267 = vld [vmem:[#allocation12] sm:$0x1]
    %v1268 = vpack.c.bf16 %v1250, %v1250
    %v1270 = vlaneseq
    %v1271 = vshrl.u32 %v1270, 7
    %v1272 = vsub.s32 0, %v1271
    %v1273 = vrot.slane %v1267, %v1272
    %v1291 = vunpack.c.l.b16 %v1251
    %v1292 = vunpack.c.l.b16 %v1252
    %v1293 = vunpack.c.l.b16 %v1253
    %v1294 = vunpack.c.l.b16 %v1254
    %v1295 = vunpack.c.l.b16 %v1255
    %v1296 = vunpack.c.l.b16 %v1256
    %v1297 = vunpack.c.l.b16 %v1257
    %v1298 = vunpack.c.l.b16 %v1258
    %v1299 = vunpack.c.l.b16 %v1259
    %v1300 = vunpack.c.l.b16 %v1260
    %v1301 = vunpack.c.l.b16 %v1261
    %v1302 = vunpack.c.l.b16 %v1262
    %v1303 = vunpack.c.l.b16 %v1263
    %v1304 = vunpack.c.l.b16 %v1264
    %v1305 = vunpack.c.l.b16 %v1265
    %v1306 = vunpack.c.l.b16 %v1266
    %v1307 = vpack.c.b16 %v1292, %v1291
    %v1308 = vpack.c.b16 %v1294, %v1293
    %v1309 = vpack.c.b16 %v1296, %v1295
    %v1310 = vpack.c.b16 %v1298, %v1297
    %v1311 = vpack.c.b16 %v1300, %v1299
    %v1312 = vpack.c.b16 %v1302, %v1301
    %v1313 = vpack.c.b16 %v1304, %v1303
    %v1314 = vpack.c.b16 %v1306, %v1305
    %1323 = vmatprep.subr.bf16.mxu0 0
    %1324 = vmatpush1.bf16.msra.mxu0 %v1314
    %1325 = vmatprep.subr.bf16.mxu0 0
    %1326 = vmatpush1.bf16.msra.mxu0 %v1313
    %1327 = vmatprep.subr.bf16.mxu0 0
    %1328 = vmatpush1.bf16.msra.mxu0 %v1312
    %1329 = vmatprep.subr.bf16.mxu0 0
    %1330 = vmatpush1.bf16.msra.mxu0 %v1311
    %1331 = vmatprep.subr.bf16.mxu0 0
    %1332 = vmatpush1.bf16.msra.mxu0 %v1310
    %1333 = vmatprep.subr.bf16.mxu0 0
    %1334 = vmatpush1.bf16.msra.mxu0 %v1309
    %1335 = vmatprep.subr.bf16.mxu0 0
    %1336 = vmatpush1.bf16.msra.mxu0 %v1308
    %1337 = vmatprep.subr.bf16.mxu0 0
    %1338 = vmatpush1.bf16.msra.mxu0 %v1307
    %1339 = vmatprep.subr.bf16.mxu0 0
    %1340 = vmatpush2.bf16.msra.mxu0 0
    %1341 = vmatprep.subr.bf16.mxu0 0
    %1342 = vmatpush2.bf16.msra.mxu0 0
    %1343 = vmatprep.subr.bf16.mxu0 0
    %1344 = vmatpush2.bf16.msra.mxu0 0
    %1345 = vmatprep.subr.bf16.mxu0 0
    %1346 = vmatpush2.bf16.msra.mxu0 0
    %1347 = vmatprep.subr.bf16.mxu0 0
    %1348 = vmatpush2.bf16.msra.mxu0 0
    %1349 = vmatprep.subr.bf16.mxu0 0
    %1350 = vmatpush2.bf16.msra.mxu0 0
    %1351 = vmatprep.subr.bf16.mxu0 0
    %1352 = vmatpush2.bf16.msra.mxu0 0
    %1353 = vmatprep.subr.bf16.mxu0 0
    %1354 = vmatpush2.bf16.msra.mxu0 0
    %1355 = vmatprep.mubr.bf16.mxu0 0
    %1356 = vmatmul.mubr.bf16.gmra.mxu0 %v1268
    %v1357 = vpop.f32.mrf.mxu0
    %v1358 = vadd.f32 %v1273, %v1357
    %v1359 = vpop.f32.mrf.mxu0
    %v1360 = vpop.f32.mrf.mxu0
    %v1361 = vpop.f32.mrf.mxu0
    %1362 = vdwg.mxu0
    %v1363 = vmax.f32 %v1358, 0.0
    %v1364 = vld [vmem:[#allocation13] sm:$0xf]
    %v1365 = vld [vmem:[#allocation13 + $0x4] sm:$0xf]
    %v1366 = vld [vmem:[#allocation13 + $0x8] sm:$0xf]
    %v1367 = vld [vmem:[#allocation13 + $0xc] sm:$0xf]
    %v1368 = vld [vmem:[#allocation13 + $0x10] sm:$0xf]
    %v1369 = vld [vmem:[#allocation13 + $0x14] sm:$0xf]
    %v1370 = vld [vmem:[#allocation13 + $0x18] sm:$0xf]
    %v1371 = vld [vmem:[#allocation13 + $0x1c] sm:$0xf]
    %v1372 = vld [vmem:[#allocation13 + $0x20] sm:$0xf]
    %v1373 = vld [vmem:[#allocation13 + $0x24] sm:$0xf]
    %v1374 = vld [vmem:[#allocation13 + $0x28] sm:$0xf]
    %v1375 = vld [vmem:[#allocation13 + $0x2c] sm:$0xf]
    %v1376 = vld [vmem:[#allocation13 + $0x30] sm:$0xf]
    %v1377 = vld [vmem:[#allocation13 + $0x34] sm:$0xf]
    %v1378 = vld [vmem:[#allocation13 + $0x38] sm:$0xf]
    %v1379 = vld [vmem:[#allocation13 + $0x3c] sm:$0xf]
    %v1380 = vld [vmem:[#allocation15] sm:$0x1]
    %v1381 = vpack.c.bf16 %v1363, %v1363
    %v1383 = vlaneseq
    %v1384 = vshrl.u32 %v1383, 7
    %v1385 = vsub.s32 0, %v1384
    %v1386 = vrot.slane %v1380, %v1385
    %v1404 = vunpack.c.l.b16 %v1364
    %v1405 = vunpack.c.l.b16 %v1365
    %v1406 = vunpack.c.l.b16 %v1366
    %v1407 = vunpack.c.l.b16 %v1367
    %v1408 = vunpack.c.l.b16 %v1368
    %v1409 = vunpack.c.l.b16 %v1369
    %v1410 = vunpack.c.l.b16 %v1370
    %v1411 = vunpack.c.l.b16 %v1371
    %v1412 = vunpack.c.l.b16 %v1372
    %v1413 = vunpack.c.l.b16 %v1373
    %v1414 = vunpack.c.l.b16 %v1374
    %v1415 = vunpack.c.l.b16 %v1375
    %v1416 = vunpack.c.l.b16 %v1376
    %v1417 = vunpack.c.l.b16 %v1377
    %v1418 = vunpack.c.l.b16 %v1378
    %v1419 = vunpack.c.l.b16 %v1379
    %v1420 = vpack.c.b16 %v1405, %v1404
    %v1421 = vpack.c.b16 %v1407, %v1406
    %v1422 = vpack.c.b16 %v1409, %v1408
    %v1423 = vpack.c.b16 %v1411, %v1410
    %v1424 = vpack.c.b16 %v1413, %v1412
    %v1425 = vpack.c.b16 %v1415, %v1414
    %v1426 = vpack.c.b16 %v1417, %v1416
    %v1427 = vpack.c.b16 %v1419, %v1418
    %1436 = vmatprep.subr.bf16.mxu0 0
    %1437 = vmatpush1.bf16.msra.mxu0 %v1427
    %1438 = vmatprep.subr.bf16.mxu0 0
    %1439 = vmatpush1.bf16.msra.mxu0 %v1426
    %1440 = vmatprep.subr.bf16.mxu0 0
    %1441 = vmatpush1.bf16.msra.mxu0 %v1425
    %1442 = vmatprep.subr.bf16.mxu0 0
    %1443 = vmatpush1.bf16.msra.mxu0 %v1424
    %1444 = vmatprep.subr.bf16.mxu0 0
    %1445 = vmatpush1.bf16.msra.mxu0 %v1423
    %1446 = vmatprep.subr.bf16.mxu0 0
    %1447 = vmatpush1.bf16.msra.mxu0 %v1422
    %1448 = vmatprep.subr.bf16.mxu0 0
    %1449 = vmatpush1.bf16.msra.mxu0 %v1421
    %1450 = vmatprep.subr.bf16.mxu0 0
    %1451 = vmatpush1.bf16.msra.mxu0 %v1420
    %1452 = vmatprep.subr.bf16.mxu0 0
    %1453 = vmatpush2.bf16.msra.mxu0 0
    %1454 = vmatprep.subr.bf16.mxu0 0
    %1455 = vmatpush2.bf16.msra.mxu0 0
    %1456 = vmatprep.subr.bf16.mxu0 0
    %1457 = vmatpush2.bf16.msra.mxu0 0
    %1458 = vmatprep.subr.bf16.mxu0 0
    %1459 = vmatpush2.bf16.msra.mxu0 0
    %1460 = vmatprep.subr.bf16.mxu0 0
    %1461 = vmatpush2.bf16.msra.mxu0 0
    %1462 = vmatprep.subr.bf16.mxu0 0
    %1463 = vmatpush2.bf16.msra.mxu0 0
    %1464 = vmatprep.subr.bf16.mxu0 0
    %1465 = vmatpush2.bf16.msra.mxu0 0
    %1466 = vmatprep.subr.bf16.mxu0 0
    %1467 = vmatpush2.bf16.msra.mxu0 0
    %1468 = vmatprep.mubr.bf16.mxu0 0
    %1469 = vmatmul.mubr.bf16.gmra.mxu0 %v1381
    %v1470 = vpop.f32.mrf.mxu0
    %v1471 = vadd.f32 %v1386, %v1470
    %v1472 = vpop.f32.mrf.mxu0
    %v1473 = vpop.f32.mrf.mxu0
    %v1474 = vpop.f32.mrf.mxu0
    %1475 = vdwg.mxu0
    %v1476 = vmax.f32 %v1471, 0.0
    %v1477 = vld [vmem:[#allocation16] sm:$0xf]
    %v1478 = vld [vmem:[#allocation16 + $0x4] sm:$0xf]
    %v1479 = vld [vmem:[#allocation16 + $0x8] sm:$0xf]
    %v1480 = vld [vmem:[#allocation16 + $0xc] sm:$0xf]
    %v1481 = vld [vmem:[#allocation16 + $0x10] sm:$0xf]
    %v1482 = vld [vmem:[#allocation16 + $0x14] sm:$0xf]
    %v1483 = vld [vmem:[#allocation16 + $0x18] sm:$0xf]
    %v1484 = vld [vmem:[#allocation16 + $0x1c] sm:$0xf]
    %v1485 = vld [vmem:[#allocation16 + $0x20] sm:$0xf]
    %v1486 = vld [vmem:[#allocation16 + $0x24] sm:$0xf]
    %v1487 = vld [vmem:[#allocation16 + $0x28] sm:$0xf]
    %v1488 = vld [vmem:[#allocation16 + $0x2c] sm:$0xf]
    %v1489 = vld [vmem:[#allocation16 + $0x30] sm:$0xf]
    %v1490 = vld [vmem:[#allocation16 + $0x34] sm:$0xf]
    %v1491 = vld [vmem:[#allocation16 + $0x38] sm:$0xf]
    %v1492 = vld [vmem:[#allocation16 + $0x3c] sm:$0xf]
    %v1493 = vld [vmem:[#allocation18] sm:$0x1]
    %v1494 = vpack.c.bf16 %v1476, %v1476
    %v1496 = vlaneseq
    %v1497 = vshrl.u32 %v1496, 7
    %v1498 = vsub.s32 0, %v1497
    %v1499 = vrot.slane %v1493, %v1498
    %v1517 = vunpack.c.l.b16 %v1477
    %v1518 = vunpack.c.l.b16 %v1478
    %v1519 = vunpack.c.l.b16 %v1479
    %v1520 = vunpack.c.l.b16 %v1480
    %v1521 = vunpack.c.l.b16 %v1481
    %v1522 = vunpack.c.l.b16 %v1482
    %v1523 = vunpack.c.l.b16 %v1483
    %v1524 = vunpack.c.l.b16 %v1484
    %v1525 = vunpack.c.l.b16 %v1485
    %v1526 = vunpack.c.l.b16 %v1486
    %v1527 = vunpack.c.l.b16 %v1487
    %v1528 = vunpack.c.l.b16 %v1488
    %v1529 = vunpack.c.l.b16 %v1489
    %v1530 = vunpack.c.l.b16 %v1490
    %v1531 = vunpack.c.l.b16 %v1491
    %v1532 = vunpack.c.l.b16 %v1492
    %v1533 = vpack.c.b16 %v1518, %v1517
    %v1534 = vpack.c.b16 %v1520, %v1519
    %v1535 = vpack.c.b16 %v1522, %v1521
    %v1536 = vpack.c.b16 %v1524, %v1523
    %v1537 = vpack.c.b16 %v1526, %v1525
    %v1538 = vpack.c.b16 %v1528, %v1527
    %v1539 = vpack.c.b16 %v1530, %v1529
    %v1540 = vpack.c.b16 %v1532, %v1531
    %1549 = vmatprep.subr.bf16.mxu0 0
    %1550 = vmatpush1.bf16.msra.mxu0 %v1540
    %1551 = vmatprep.subr.bf16.mxu0 0
    %1552 = vmatpush1.bf16.msra.mxu0 %v1539
    %1553 = vmatprep.subr.bf16.mxu0 0
    %1554 = vmatpush1.bf16.msra.mxu0 %v1538
    %1555 = vmatprep.subr.bf16.mxu0 0
    %1556 = vmatpush1.bf16.msra.mxu0 %v1537
    %1557 = vmatprep.subr.bf16.mxu0 0
    %1558 = vmatpush1.bf16.msra.mxu0 %v1536
    %1559 = vmatprep.subr.bf16.mxu0 0
    %1560 = vmatpush1.bf16.msra.mxu0 %v1535
    %1561 = vmatprep.subr.bf16.mxu0 0
    %1562 = vmatpush1.bf16.msra.mxu0 %v1534
    %1563 = vmatprep.subr.bf16.mxu0 0
    %1564 = vmatpush1.bf16.msra.mxu0 %v1533
    %1565 = vmatprep.subr.bf16.mxu0 0
    %1566 = vmatpush2.bf16.msra.mxu0 0
    %1567 = vmatprep.subr.bf16.mxu0 0
    %1568 = vmatpush2.bf16.msra.mxu0 0
    %1569 = vmatprep.subr.bf16.mxu0 0
    %1570 = vmatpush2.bf16.msra.mxu0 0
    %1571 = vmatprep.subr.bf16.mxu0 0
    %1572 = vmatpush2.bf16.msra.mxu0 0
    %1573 = vmatprep.subr.bf16.mxu0 0
    %1574 = vmatpush2.bf16.msra.mxu0 0
    %1575 = vmatprep.subr.bf16.mxu0 0
    %1576 = vmatpush2.bf16.msra.mxu0 0
    %1577 = vmatprep.subr.bf16.mxu0 0
    %1578 = vmatpush2.bf16.msra.mxu0 0
    %1579 = vmatprep.subr.bf16.mxu0 0
    %1580 = vmatpush2.bf16.msra.mxu0 0
    %1581 = vmatprep.mubr.bf16.mxu0 0
    %1582 = vmatmul.mubr.bf16.gmra.mxu0 %v1494
    %v1583 = vpop.f32.mrf.mxu0
    %v1584 = vadd.f32 %v1499, %v1583
    %v1585 = vpop.f32.mrf.mxu0
    %v1586 = vpop.f32.mrf.mxu0
    %v1587 = vpop.f32.mrf.mxu0
    %1588 = vdwg.mxu0
    %v1589 = vmax.f32 %v1584, 0.0
    %v1590 = vld [vmem:[#allocation19] sm:$0xf]
    %v1591 = vld [vmem:[#allocation19 + $0x4] sm:$0xf]
    %v1592 = vld [vmem:[#allocation19 + $0x8] sm:$0xf]
    %v1593 = vld [vmem:[#allocation19 + $0xc] sm:$0xf]
    %v1594 = vld [vmem:[#allocation19 + $0x10] sm:$0xf]
    %v1595 = vld [vmem:[#allocation19 + $0x14] sm:$0xf]
    %v1596 = vld [vmem:[#allocation19 + $0x18] sm:$0xf]
    %v1597 = vld [vmem:[#allocation19 + $0x1c] sm:$0xf]
    %v1598 = vld [vmem:[#allocation19 + $0x20] sm:$0xf]
    %v1599 = vld [vmem:[#allocation19 + $0x24] sm:$0xf]
    %v1600 = vld [vmem:[#allocation19 + $0x28] sm:$0xf]
    %v1601 = vld [vmem:[#allocation19 + $0x2c] sm:$0xf]
    %v1602 = vld [vmem:[#allocation19 + $0x30] sm:$0xf]
    %v1603 = vld [vmem:[#allocation19 + $0x34] sm:$0xf]
    %v1604 = vld [vmem:[#allocation19 + $0x38] sm:$0xf]
    %v1605 = vld [vmem:[#allocation19 + $0x3c] sm:$0xf]
    %v1606 = vld [vmem:[#allocation21] sm:$0x1]
    %v1607 = vpack.c.bf16 %v1589, %v1589
    %v1609 = vlaneseq
    %v1610 = vshrl.u32 %v1609, 7
    %v1611 = vsub.s32 0, %v1610
    %v1612 = vrot.slane %v1606, %v1611
    %v1630 = vunpack.c.l.b16 %v1590
    %v1631 = vunpack.c.l.b16 %v1591
    %v1632 = vunpack.c.l.b16 %v1592
    %v1633 = vunpack.c.l.b16 %v1593
    %v1634 = vunpack.c.l.b16 %v1594
    %v1635 = vunpack.c.l.b16 %v1595
    %v1636 = vunpack.c.l.b16 %v1596
    %v1637 = vunpack.c.l.b16 %v1597
    %v1638 = vunpack.c.l.b16 %v1598
    %v1639 = vunpack.c.l.b16 %v1599
    %v1640 = vunpack.c.l.b16 %v1600
    %v1641 = vunpack.c.l.b16 %v1601
    %v1642 = vunpack.c.l.b16 %v1602
    %v1643 = vunpack.c.l.b16 %v1603
    %v1644 = vunpack.c.l.b16 %v1604
    %v1645 = vunpack.c.l.b16 %v1605
    %v1646 = vpack.c.b16 %v1631, %v1630
    %v1647 = vpack.c.b16 %v1633, %v1632
    %v1648 = vpack.c.b16 %v1635, %v1634
    %v1649 = vpack.c.b16 %v1637, %v1636
    %v1650 = vpack.c.b16 %v1639, %v1638
    %v1651 = vpack.c.b16 %v1641, %v1640
    %v1652 = vpack.c.b16 %v1643, %v1642
    %v1653 = vpack.c.b16 %v1645, %v1644
    %1662 = vmatprep.subr.bf16.mxu0 0
    %1663 = vmatpush1.bf16.msra.mxu0 %v1653
    %1664 = vmatprep.subr.bf16.mxu0 0
    %1665 = vmatpush1.bf16.msra.mxu0 %v1652
    %1666 = vmatprep.subr.bf16.mxu0 0
    %1667 = vmatpush1.bf16.msra.mxu0 %v1651
    %1668 = vmatprep.subr.bf16.mxu0 0
    %1669 = vmatpush1.bf16.msra.mxu0 %v1650
    %1670 = vmatprep.subr.bf16.mxu0 0
    %1671 = vmatpush1.bf16.msra.mxu0 %v1649
    %1672 = vmatprep.subr.bf16.mxu0 0
    %1673 = vmatpush1.bf16.msra.mxu0 %v1648
    %1674 = vmatprep.subr.bf16.mxu0 0
    %1675 = vmatpush1.bf16.msra.mxu0 %v1647
    %1676 = vmatprep.subr.bf16.mxu0 0
    %1677 = vmatpush1.bf16.msra.mxu0 %v1646
    %1678 = vmatprep.subr.bf16.mxu0 0
    %1679 = vmatpush2.bf16.msra.mxu0 0
    %1680 = vmatprep.subr.bf16.mxu0 0
    %1681 = vmatpush2.bf16.msra.mxu0 0
    %1682 = vmatprep.subr.bf16.mxu0 0
    %1683 = vmatpush2.bf16.msra.mxu0 0
    %1684 = vmatprep.subr.bf16.mxu0 0
    %1685 = vmatpush2.bf16.msra.mxu0 0
    %1686 = vmatprep.subr.bf16.mxu0 0
    %1687 = vmatpush2.bf16.msra.mxu0 0
    %1688 = vmatprep.subr.bf16.mxu0 0
    %1689 = vmatpush2.bf16.msra.mxu0 0
    %1690 = vmatprep.subr.bf16.mxu0 0
    %1691 = vmatpush2.bf16.msra.mxu0 0
    %1692 = vmatprep.subr.bf16.mxu0 0
    %1693 = vmatpush2.bf16.msra.mxu0 0
    %1694 = vmatprep.mubr.bf16.mxu0 0
    %1695 = vmatmul.mubr.bf16.gmra.mxu0 %v1607
    %v1696 = vpop.f32.mrf.mxu0
    %v1697 = vadd.f32 %v1612, %v1696
    %v1698 = vpop.f32.mrf.mxu0
    %v1699 = vpop.f32.mrf.mxu0
    %v1700 = vpop.f32.mrf.mxu0
    %1701 = vdwg.mxu0
    %v1702 = vmax.f32 %v1697, 0.0
    %v1703 = vld [vmem:[#allocation22] sm:$0xf]
    %v1704 = vld [vmem:[#allocation22 + $0x4] sm:$0xf]
    %v1705 = vld [vmem:[#allocation22 + $0x8] sm:$0xf]
    %v1706 = vld [vmem:[#allocation22 + $0xc] sm:$0xf]
    %v1707 = vld [vmem:[#allocation22 + $0x10] sm:$0xf]
    %v1708 = vld [vmem:[#allocation22 + $0x14] sm:$0xf]
    %v1709 = vld [vmem:[#allocation22 + $0x18] sm:$0xf]
    %v1710 = vld [vmem:[#allocation22 + $0x1c] sm:$0xf]
    %v1711 = vld [vmem:[#allocation22 + $0x20] sm:$0xf]
    %v1712 = vld [vmem:[#allocation22 + $0x24] sm:$0xf]
    %v1713 = vld [vmem:[#allocation22 + $0x28] sm:$0xf]
    %v1714 = vld [vmem:[#allocation22 + $0x2c] sm:$0xf]
    %v1715 = vld [vmem:[#allocation22 + $0x30] sm:$0xf]
    %v1716 = vld [vmem:[#allocation22 + $0x34] sm:$0xf]
    %v1717 = vld [vmem:[#allocation22 + $0x38] sm:$0xf]
    %v1718 = vld [vmem:[#allocation22 + $0x3c] sm:$0xf]
    %v1719 = vld [vmem:[#allocation24] sm:$0x1]
    %v1720 = vpack.c.bf16 %v1702, %v1702
    %v1722 = vlaneseq
    %v1723 = vshrl.u32 %v1722, 7
    %v1724 = vsub.s32 0, %v1723
    %v1725 = vrot.slane %v1719, %v1724
    %v1743 = vunpack.c.l.b16 %v1703
    %v1744 = vunpack.c.l.b16 %v1704
    %v1745 = vunpack.c.l.b16 %v1705
    %v1746 = vunpack.c.l.b16 %v1706
    %v1747 = vunpack.c.l.b16 %v1707
    %v1748 = vunpack.c.l.b16 %v1708
    %v1749 = vunpack.c.l.b16 %v1709
    %v1750 = vunpack.c.l.b16 %v1710
    %v1751 = vunpack.c.l.b16 %v1711
    %v1752 = vunpack.c.l.b16 %v1712
    %v1753 = vunpack.c.l.b16 %v1713
    %v1754 = vunpack.c.l.b16 %v1714
    %v1755 = vunpack.c.l.b16 %v1715
    %v1756 = vunpack.c.l.b16 %v1716
    %v1757 = vunpack.c.l.b16 %v1717
    %v1758 = vunpack.c.l.b16 %v1718
    %v1759 = vpack.c.b16 %v1744, %v1743
    %v1760 = vpack.c.b16 %v1746, %v1745
    %v1761 = vpack.c.b16 %v1748, %v1747
    %v1762 = vpack.c.b16 %v1750, %v1749
    %v1763 = vpack.c.b16 %v1752, %v1751
    %v1764 = vpack.c.b16 %v1754, %v1753
    %v1765 = vpack.c.b16 %v1756, %v1755
    %v1766 = vpack.c.b16 %v1758, %v1757
    %1775 = vmatprep.subr.bf16.mxu0 0
    %1776 = vmatpush1.bf16.msra.mxu0 %v1766
    %1777 = vmatprep.subr.bf16.mxu0 0
    %1778 = vmatpush1.bf16.msra.mxu0 %v1765
    %1779 = vmatprep.subr.bf16.mxu0 0
    %1780 = vmatpush1.bf16.msra.mxu0 %v1764
    %1781 = vmatprep.subr.bf16.mxu0 0
    %1782 = vmatpush1.bf16.msra.mxu0 %v1763
    %1783 = vmatprep.subr.bf16.mxu0 0
    %1784 = vmatpush1.bf16.msra.mxu0 %v1762
    %1785 = vmatprep.subr.bf16.mxu0 0
    %1786 = vmatpush1.bf16.msra.mxu0 %v1761
    %1787 = vmatprep.subr.bf16.mxu0 0
    %1788 = vmatpush1.bf16.msra.mxu0 %v1760
    %1789 = vmatprep.subr.bf16.mxu0 0
    %1790 = vmatpush1.bf16.msra.mxu0 %v1759
    %1791 = vmatprep.subr.bf16.mxu0 0
    %1792 = vmatpush2.bf16.msra.mxu0 0
    %1793 = vmatprep.subr.bf16.mxu0 0
    %1794 = vmatpush2.bf16.msra.mxu0 0
    %1795 = vmatprep.subr.bf16.mxu0 0
    %1796 = vmatpush2.bf16.msra.mxu0 0
    %1797 = vmatprep.subr.bf16.mxu0 0
    %1798 = vmatpush2.bf16.msra.mxu0 0
    %1799 = vmatprep.subr.bf16.mxu0 0
    %1800 = vmatpush2.bf16.msra.mxu0 0
    %1801 = vmatprep.subr.bf16.mxu0 0
    %1802 = vmatpush2.bf16.msra.mxu0 0
    %1803 = vmatprep.subr.bf16.mxu0 0
    %1804 = vmatpush2.bf16.msra.mxu0 0
    %1805 = vmatprep.subr.bf16.mxu0 0
    %1806 = vmatpush2.bf16.msra.mxu0 0
    %1807 = vmatprep.mubr.bf16.mxu0 0
    %1808 = vmatmul.mubr.bf16.gmra.mxu0 %v1720
    %v1809 = vpop.f32.mrf.mxu0
    %v1810 = vadd.f32 %v1725, %v1809
    %v1811 = vpop.f32.mrf.mxu0
    %v1812 = vpop.f32.mrf.mxu0
    %v1813 = vpop.f32.mrf.mxu0
    %1814 = vdwg.mxu0
    %v1815 = vxor.u32 %v1810, 2147483648
    %v1816 = vmul.f32 %v1815, 1.442695
    %v1817 = vpow.pop %v1816
    %v1818 = vadd.f32 %v1817, 1.0
    %v1819 = vrcp.pop %v1818
    %v1820 = vmul.f32 1.0, %v1819
    %v1821 = vld [vmem:[%s17] sm:$0xf]
    %v1822 = vld [vmem:[%s17 + $0x4] sm:$0xf]
    %v1823 = vld [vmem:[%s17 + $0x8] sm:$0xf]
    %v1824 = vld [vmem:[%s17 + $0xc] sm:$0xf]
    %v1825 = vld [vmem:[%s17 + $0x10] sm:$0xf]
    %v1826 = vld [vmem:[%s17 + $0x14] sm:$0xf]
    %v1827 = vld [vmem:[%s17 + $0x18] sm:$0xf]
    %v1828 = vld [vmem:[%s17 + $0x1c] sm:$0xf]
    %v1829 = vld [vmem:[%s17 + $0x20] sm:$0xf]
    %v1830 = vld [vmem:[%s17 + $0x24] sm:$0xf]
    %v1831 = vld [vmem:[%s17 + $0x28] sm:$0xf]
    %v1832 = vld [vmem:[%s17 + $0x2c] sm:$0xf]
    %v1833 = vld [vmem:[%s17 + $0x30] sm:$0xf]
    %v1834 = vld [vmem:[%s17 + $0x34] sm:$0xf]
    %v1835 = vld [vmem:[%s17 + $0x38] sm:$0xf]
    %v1836 = vld [vmem:[%s17 + $0x3c] sm:$0xf]
    %v1837 = vld [vmem:[%s18] sm:$0x1]
    %v1838 = vpack.c.bf16 %v1820, %v1820
    %v1840 = vlaneseq
    %v1841 = vshrl.u32 %v1840, 7
    %v1842 = vsub.s32 0, %v1841
    %v1843 = vrot.slane %v1837, %v1842
    %v1861 = vunpack.c.l.b16 %v1821
    %v1862 = vunpack.c.l.b16 %v1822
    %v1863 = vunpack.c.l.b16 %v1823
    %v1864 = vunpack.c.l.b16 %v1824
    %v1865 = vunpack.c.l.b16 %v1825
    %v1866 = vunpack.c.l.b16 %v1826
    %v1867 = vunpack.c.l.b16 %v1827
    %v1868 = vunpack.c.l.b16 %v1828
    %v1869 = vunpack.c.l.b16 %v1829
    %v1870 = vunpack.c.l.b16 %v1830
    %v1871 = vunpack.c.l.b16 %v1831
    %v1872 = vunpack.c.l.b16 %v1832
    %v1873 = vunpack.c.l.b16 %v1833
    %v1874 = vunpack.c.l.b16 %v1834
    %v1875 = vunpack.c.l.b16 %v1835
    %v1876 = vunpack.c.l.b16 %v1836
    %v1877 = vpack.c.b16 %v1862, %v1861
    %v1878 = vpack.c.b16 %v1864, %v1863
    %v1879 = vpack.c.b16 %v1866, %v1865
    %v1880 = vpack.c.b16 %v1868, %v1867
    %v1881 = vpack.c.b16 %v1870, %v1869
    %v1882 = vpack.c.b16 %v1872, %v1871
    %v1883 = vpack.c.b16 %v1874, %v1873
    %v1884 = vpack.c.b16 %v1876, %v1875
    %1893 = vmatprep.subr.bf16.mxu0 0
    %1894 = vmatpush1.bf16.msra.mxu0 %v1884
    %1895 = vmatprep.subr.bf16.mxu0 0
    %1896 = vmatpush1.bf16.msra.mxu0 %v1883
    %1897 = vmatprep.subr.bf16.mxu0 0
    %1898 = vmatpush1.bf16.msra.mxu0 %v1882
    %1899 = vmatprep.subr.bf16.mxu0 0
    %1900 = vmatpush1.bf16.msra.mxu0 %v1881
    %1901 = vmatprep.subr.bf16.mxu0 0
    %1902 = vmatpush1.bf16.msra.mxu0 %v1880
    %1903 = vmatprep.subr.bf16.mxu0 0
    %1904 = vmatpush1.bf16.msra.mxu0 %v1879
    %1905 = vmatprep.subr.bf16.mxu0 0
    %1906 = vmatpush1.bf16.msra.mxu0 %v1878
    %1907 = vmatprep.subr.bf16.mxu0 0
    %1908 = vmatpush1.bf16.msra.mxu0 %v1877
    %1909 = vmatprep.subr.bf16.mxu0 0
    %1910 = vmatpush2.bf16.msra.mxu0 0
    %1911 = vmatprep.subr.bf16.mxu0 0
    %1912 = vmatpush2.bf16.msra.mxu0 0
    %1913 = vmatprep.subr.bf16.mxu0 0
    %1914 = vmatpush2.bf16.msra.mxu0 0
    %1915 = vmatprep.subr.bf16.mxu0 0
    %1916 = vmatpush2.bf16.msra.mxu0 0
    %1917 = vmatprep.subr.bf16.mxu0 0
    %1918 = vmatpush2.bf16.msra.mxu0 0
    %1919 = vmatprep.subr.bf16.mxu0 0
    %1920 = vmatpush2.bf16.msra.mxu0 0
    %1921 = vmatprep.subr.bf16.mxu0 0
    %1922 = vmatpush2.bf16.msra.mxu0 0
    %1923 = vmatprep.subr.bf16.mxu0 0
    %1924 = vmatpush2.bf16.msra.mxu0 0
    %1925 = vmatprep.mubr.bf16.mxu0 0
    %1926 = vmatmul.mubr.bf16.gmra.mxu0 %v1838
    %v1927 = vpop.f32.mrf.mxu0
    %v1928 = vadd.f32 %v1843, %v1927
    %v1929 = vpop.f32.mrf.mxu0
    %v1930 = vpop.f32.mrf.mxu0
    %v1931 = vpop.f32.mrf.mxu0
    %1932 = vdwg.mxu0
    %1933 = vst [vmem:[%s19] sm:$0xff] %v1928
    // Predicated region
    $region138: #{heat_supply_mlp.1} parent=1 // pred_check
      _
    $region139: #{heat_supply_mlp.1} parent=1 // pred_check_branch
      %1935 = sbr.rel (0) target = $region141
    $region140: #{heat_supply_mlp.1} parent=1 // pred_region
      _
    $region141: #{heat_supply_mlp.1} parent=1 // pred_fallthru
      _
    // Predicated region
    $region142: #{heat_supply_mlp.1} parent=1 // pred_check
      _
    $region143: #{heat_supply_mlp.1} parent=1 // pred_check_branch
      %1937 = sbr.rel (0) target = $region145
    $region144: #{heat_supply_mlp.1} parent=1 // pred_region
      _
    $region145: #{heat_supply_mlp.1} parent=1 // pred_fallthru
      _
    %1938 = vsyncpa [#allocation3], 1
    %1939 = vsyncpa [#allocation5], 1
    %1940 = vsyncpa [#allocation8], 1
    %1941 = vsyncpa [#allocation11], 1
    %1942 = vsyncpa [#allocation14], 1
    %1943 = vsyncpa [#allocation17], 1
    %1944 = vsyncpa [#allocation20], 1
    %1945 = vsyncpa [#allocation23], 1

</llo_original>
